<compile_context>
chip_gen: v7x
topology: tpu7x:2x2x1
jax: 0.10.0
libtpu: 0.0.40
codegen_flags: <defaults>
</compile_context>

<pallas_src>
import jax
import jax.numpy as jnp
from jax.experimental import pallas as pl
from jax.experimental.pallas import tpu as pltpu


def _upconv_add_kernel(x1_ref, w_ref, b_ref, x2_ref, o_ref):
    # x1_ref: (Cin, T)        activations, one batch element x one spatial tile
    # w_ref : (4*Cout, Cin)   bf16 transposed-conv weight, resident across grid
    # b_ref : (4*Cout, 1)     f32 bias (replicated per (ki, kj)), resident
    # x2_ref: (4*Cout, T)     skip-connection tile (same buffer as o_ref)
    # o_ref : (4*Cout, T)
    x1 = x1_ref[...].astype(jnp.bfloat16)
    y = jnp.dot(w_ref[...], x1, preferred_element_type=jnp.float32)  # MXU, bf16 in / f32 acc
    o_ref[...] = (y + b_ref[...] + x2_ref[...].astype(jnp.float32)).astype(o_ref.dtype)


def _pick_spatial_tile(hw, cin, c4, x1_itemsize, out_itemsize):
    """Lane-dim tile over flattened H*W: multiple of 128 (unmasked stores) and
    sized so the double-buffered block set stays under ~16 MiB (v7x-safe)."""
    budget = 16 * 1024 * 1024
    divisors = [t for t in (512, 256, 128) if hw % t == 0]
    for t in divisors:
        per_step = 2 * (cin * t * x1_itemsize + 2 * c4 * t * out_itemsize)
        if per_step <= budget:
            return t
    if divisors:
        return divisors[-1]
    return hw  # odd spatial size: fall back to the full extent (== full dim is legal)


def _up_forward(x1, x2, weight, bias):
    """x1: (N, Cin, H, W), x2: (N, Cin//2, H2, W2), weight: (Cin, Cout, 2, 2), bias: (Cout,)."""
    N, Cin, H, W = x1.shape
    Cout = Cin // 2
    _, C2, H2, W2 = x2.shape
    assert C2 == Cout
    C4 = 4 * Cout
    HW = H * W

    diffY = H2 - 2 * H
    diffX = W2 - 2 * W
    # TODO(synk): negative diffY/diffX (F.pad with negative pad == cropping) not handled.
    assert diffY >= 0 and diffX >= 0
    py0, px0 = diffY // 2, diffX // 2
    padded = (diffY != 0) or (diffX != 0)

    out_dtype = x2.dtype

    # ---- cheap layout prep ---------------------------------------------------
    # x1 NCHW -> (N, Cin, H*W): pure reshape (no transpose / extra HBM pass).
    x1_r = x1.reshape(N, Cin, HW)
    # weight (Cin, Cout, 2, 2) -> (ki, kj, Cout, Cin) -> (4*Cout, Cin), bf16 (tiny).
    w_t = weight.transpose(2, 3, 1, 0).reshape(C4, Cin).astype(jnp.bfloat16)
    # bias replicated per (ki, kj): row index = (ki*2 + kj)*Cout + oc.
    b4 = jnp.tile(bias, 4).reshape(C4, 1).astype(jnp.float32)

    # x2 region overlapping the upsampled x1, rearranged to (N, 4*Cout, H*W) with
    # the same (ki, kj, oc) row ordering as w_t.  The one unavoidable transpose.
    if padded:
        x2_region = jax.lax.dynamic_slice(x2, (0, 0, py0, px0), (N, Cout, 2 * H, 2 * W))
    else:
        x2_region = x2
    x2_blk = (
        x2_region.reshape(N, Cout, H, 2, W, 2)
        .transpose(0, 3, 5, 1, 2, 4)
        .reshape(N, C4, HW)
        .astype(out_dtype)
    )

    # ---- tiled pallas call ---------------------------------------------------
    t_hw = _pick_spatial_tile(HW, Cin, C4, x1.dtype.itemsize, jnp.dtype(out_dtype).itemsize)
    num_t = HW // t_hw

    out_blk = pl.pallas_call(
        _upconv_add_kernel,
        out_shape=jax.ShapeDtypeStruct((N, C4, HW), out_dtype),
        grid=(N, num_t),
        in_specs=[
            pl.BlockSpec((pl.Squeezed(), Cin, t_hw), lambda n, t: (n, 0, t)),
            pl.BlockSpec((C4, Cin), lambda n, t: (0, 0)),   # weight stays resident
            pl.BlockSpec((C4, 1), lambda n, t: (0, 0)),     # bias stays resident
            pl.BlockSpec((pl.Squeezed(), C4, t_hw), lambda n, t: (n, 0, t)),
        ],
        out_specs=pl.BlockSpec((pl.Squeezed(), C4, t_hw), lambda n, t: (n, 0, t)),
        input_output_aliases={3: 0},  # write the sum in place into x2_blk's buffer
        compiler_params=pltpu.CompilerParams(
            dimension_semantics=("parallel", "parallel"),
            vmem_limit_bytes=32 * 1024 * 1024,  # blocks sized for <=16 MiB; explicit, v7x-safe
        ),
    )(x1_r, w_t, b4, x2_blk)

    # ---- back to NCHW ----------------------------------------------------------
    region_out = (
        out_blk.reshape(N, 2, 2, Cout, H, W)
        .transpose(0, 3, 4, 1, 5, 2)
        .reshape(N, Cout, 2 * H, 2 * W)
    )
    if padded:
        # Outside the region the zero-padded upsample contributes nothing -> keep x2.
        return jax.lax.dynamic_update_slice(x2, region_out, (0, 0, py0, px0))
    return region_out


up_forward = jax.jit(_up_forward)


def reference_forward(x1, x2, weight, bias):
    """Pure-JAX reference of ConvTranspose2d(k=2, s=2) + pad + add (diff >= 0)."""
    N, Cin, H, W = x1.shape
    Cout = Cin // 2
    _, _, H2, W2 = x2.shape
    y = jnp.einsum(
        "nihw,iokl->nohkwl", x1, weight,
        preferred_element_type=jnp.float32, precision=jax.lax.Precision.HIGHEST,
    ).reshape(N, Cout, 2 * H, 2 * W)
    y = y + bias[None, :, None, None]
    diffY, diffX = H2 - 2 * H, W2 - 2 * W
    y = jnp.pad(
        y,
        ((0, 0), (0, 0), (diffY // 2, diffY - diffY // 2), (diffX // 2, diffX - diffX // 2)),
    )
    return x2 + y


if __name__ == "__main__":
    key = jax.random.PRNGKey(0)
    k1, k2, kw, kb = jax.random.split(key, 4)

    # Small U-Net-like shapes: 4*Cout = 128 (lane dense), HW = 1024 -> 2 spatial tiles.
    N, in_ch, H, W = 2, 64, 32, 32
    out_ch = in_ch // 2
    H2, W2 = 2 * H, 2 * W  # diffX = diffY = 0 (typical skip connection)

    x1 = jax.random.normal(k1, (N, in_ch, H, W), dtype=jnp.float32)
    x2 = jax.random.normal(k2, (N, out_ch, H2, W2), dtype=jnp.float32)
    weight = 0.1 * jax.random.normal(kw, (in_ch, out_ch, 2, 2), dtype=jnp.float32)
    bias = 0.1 * jax.random.normal(kb, (out_ch,), dtype=jnp.float32)

    out = jax.block_until_ready(up_forward(x1, x2, weight, bias))

    ref = reference_forward(x1, x2, weight, bias)
    assert out.shape == ref.shape == (N, out_ch, H2, W2)
    max_err = float(jnp.max(jnp.abs(out - ref)))
    assert jnp.allclose(out, ref, atol=2e-2, rtol=2e-2), max_err

    print("KERNEL_OK")
</pallas_src>

<mosaic_0001>
module attributes {stable_mosaic.version = 11 : i64} {
  func.func @_upconv_add_kernel(%arg0: i32, %arg1: i32, %arg2: memref<1x64x512xf32, #tpu.memory_space<vmem>>, %arg3: memref<128x64xbf16, #tpu.memory_space<vmem>>, %arg4: memref<128x1xf32, #tpu.memory_space<vmem>>, %arg5: memref<1x128x512xf32, #tpu.memory_space<vmem>>, %arg6: memref<1x128x512xf32, #tpu.memory_space<vmem>>) attributes {dimension_semantics = [#tpu.dimension_semantics<parallel>, #tpu.dimension_semantics<parallel>], iteration_bounds = array<i64: 2, 2>, scalar_prefetch = 0 : i64, scratch_operands = 0 : i64, tpu.core_type = #tpu.core_type<tc>, window_params = [{transform_indices = @transform_0, window_bounds = array<i64: 1, 64, 512>}, {pipeline_mode = #tpu.pipeline_mode<synchronous>, transform_indices = @transform_1, window_bounds = array<i64: 128, 64>}, {pipeline_mode = #tpu.pipeline_mode<synchronous>, transform_indices = @transform_2, window_bounds = array<i64: 128, 1>}, {transform_indices = @transform_3, window_bounds = array<i64: 1, 128, 512>}, {transform_indices = @transform_4, window_bounds = array<i64: 1, 128, 512>}]} {
    %c0 = arith.constant 0 : index
    %c0_0 = arith.constant 0 : index
    %c0_1 = arith.constant 0 : index
    %0 = vector.load %arg2[%c0, %c0_0, %c0_1] : memref<1x64x512xf32, #tpu.memory_space<vmem>>, vector<1x64x512xf32>
    %1 = vector.shape_cast %0 : vector<1x64x512xf32> to vector<64x512xf32>
    %2 = arith.truncf %1 : vector<64x512xf32> to vector<64x512xbf16>
    %c0_2 = arith.constant 0 : index
    %c0_3 = arith.constant 0 : index
    %3 = vector.load %arg3[%c0_2, %c0_3] : memref<128x64xbf16, #tpu.memory_space<vmem>>, vector<128x64xbf16>
    %cst = arith.constant dense<0.000000e+00> : vector<128x512xf32>
    %4 = tpu.matmul %3, %2, %cst {dimension_numbers = #tpu.dot_dimension_numbers<[1], [0], [0], [1], [0, 0, 1, 1], [], []>} : vector<128x64xbf16>, vector<64x512xbf16>, vector<128x512xf32> -> vector<128x512xf32>
    %c0_4 = arith.constant 0 : index
    %c0_5 = arith.constant 0 : index
    %5 = vector.load %arg4[%c0_4, %c0_5] : memref<128x1xf32, #tpu.memory_space<vmem>>, vector<128x1xf32>
    %6 = vector.broadcast %5 : vector<128x1xf32> to vector<128x512xf32>
    %7 = arith.addf %4, %6 : vector<128x512xf32>
    %c0_6 = arith.constant 0 : index
    %c0_7 = arith.constant 0 : index
    %c0_8 = arith.constant 0 : index
    %8 = vector.load %arg5[%c0_6, %c0_7, %c0_8] : memref<1x128x512xf32, #tpu.memory_space<vmem>>, vector<1x128x512xf32>
    %9 = vector.shape_cast %8 : vector<1x128x512xf32> to vector<128x512xf32>
    %10 = arith.addf %7, %9 : vector<128x512xf32>
    %c0_9 = arith.constant 0 : index
    %c0_10 = arith.constant 0 : index
    %c0_11 = arith.constant 0 : index
    %11 = vector.load %arg6[%c0_9, %c0_10, %c0_11] : memref<1x128x512xf32, #tpu.memory_space<vmem>>, vector<1x128x512xf32>
    %12 = vector.shape_cast %11 : vector<1x128x512xf32> to vector<128x512xf32>
    %13 = vector.shape_cast %10 : vector<128x512xf32> to vector<1x128x512xf32>
    tpu.vector_store %arg6[%c0_9, %c0_10, %c0_11], %13 {strides = array<i32>} : memref<1x128x512xf32, #tpu.memory_space<vmem>>, vector<1x128x512xf32>,
    return
  }
  func.func @transform_0(%arg0: i32, %arg1: i32) -> (i32, i32, i32) {
    %c0_i32 = arith.constant 0 : i32
    %c0_i32_0 = arith.constant 0 : i32
    return %arg0, %c0_i32, %arg1 : i32, i32, i32
  }
  func.func @transform_1(%arg0: i32, %arg1: i32) -> (i32, i32) {
    %c0_i32 = arith.constant 0 : i32
    %c0_i32_0 = arith.constant 0 : i32
    %c0_i32_1 = arith.constant 0 : i32
    return %c0_i32, %c0_i32_0 : i32, i32
  }
  func.func @transform_2(%arg0: i32, %arg1: i32) -> (i32, i32) {
    %c0_i32 = arith.constant 0 : i32
    %c0_i32_0 = arith.constant 0 : i32
    %c0_i32_1 = arith.constant 0 : i32
    return %c0_i32, %c0_i32_0 : i32, i32
  }
  func.func @transform_3(%arg0: i32, %arg1: i32) -> (i32, i32, i32) {
    %c0_i32 = arith.constant 0 : i32
    %c0_i32_0 = arith.constant 0 : i32
    return %arg0, %c0_i32, %arg1 : i32, i32, i32
  }
  func.func @transform_4(%arg0: i32, %arg1: i32) -> (i32, i32, i32) {
    %c0_i32 = arith.constant 0 : i32
    %c0_i32_0 = arith.constant 0 : i32
    return %arg0, %c0_i32, %arg1 : i32, i32, i32
  }
}

</mosaic_0001>

<llo_original>
// kernel: tile.8
$region0: #{tile.8}
  #allocation0 [shape = 's32[1]{0}', space=sflag, size = 0x4, scoped, tag = 'scoped memory for tile.8']
  %s0 = inlined_call_operand.vmem [shape: f32[32], index: 0, kind: input, shape index: {}]
  %s1 = inlined_call_operand.vmem [shape: f32[4,32], index: 1, kind: output, shape index: {}]
  // Predicated region
  $region2: #{tile.8} parent=0 // pred_check
    _
  $region3: #{tile.8} parent=0 // pred_check_branch
    %3 = sbr.rel (0) target = $region5
  $region4: #{tile.8} parent=0 // pred_region
    _
  $region5: #{tile.8} parent=0 // pred_fallthru
    _
  %v4 = vld [vmem:[%s0] ss:$0 sm:$0xff]
  %5 = vst [vmem:[%s1] sm:$0xf] %v4

// kernel: tile.0
$region0: #{tile.0}
  %s0 = inlined_call_operand.vmem [shape: f32[4,32], index: 0, kind: input, shape index: {}]
  %s1 = inlined_call_operand.vmem [shape: f32[128,1], index: 1, kind: output, shape index: {}]
  $region1: #{tile.0} parent=0
    #allocation0 [shape = 'u8[4096]{0}', space=vmem, size = 0x1000, scoped, tag = 'scoped mem for input reshape']
    %s3 = sshllo.u32 0, 4
    %v4 = vld [vmem:[%s0] sm:%s3]
    %5 = vst [vmem:[#allocation0] sm:%s3] %v4
    %v6 = vld [vmem:[#allocation0] sm:$0xf]
    %vm7 = vcmask 7168
    %8 = vst.msk [vmem:[%s1] sm:$0x1] %vm7, %v6
    %s9 = scalar_lea.vmem %s1, 31
    %10 = vst.msk [vmem:[%s9] sm:$0x2] %vm7, %v6
    %s11 = scalar_lea.vmem %s1, 62
    %12 = vst.msk [vmem:[%s11] sm:$0x4] %vm7, %v6
    %s13 = scalar_lea.vmem %s1, 93
    %14 = vst.msk [vmem:[%s13] sm:$0x8] %vm7, %v6
    %v15 = vld [vmem:[#allocation0] sm:$0xf]
    %16 = vrot.lane.b32.xlu0 %v15, 127
    %v17 = vpop.permute.xlu0 %16
    %vm18 = vcmask 7168
    %s19 = scalar_lea.vmem %s1, 1
    %20 = vst.msk [vmem:[%s19] sm:$0x1] %vm18, %v17
    %s21 = scalar_lea.vmem %s1, 32
    %22 = vst.msk [vmem:[%s21] sm:$0x2] %vm18, %v17
    %s23 = scalar_lea.vmem %s1, 63
    %24 = vst.msk [vmem:[%s23] sm:$0x4] %vm18, %v17
    %s25 = scalar_lea.vmem %s1, 94
    %26 = vst.msk [vmem:[%s25] sm:$0x8] %vm18, %v17
    %v27 = vld [vmem:[#allocation0] sm:$0xf]
    %28 = vrot.lane.b32.xlu0 %v27, 126
    %v29 = vpop.permute.xlu0 %28
    %vm30 = vcmask 7168
    %s31 = scalar_lea.vmem %s1, 2
    %32 = vst.msk [vmem:[%s31] sm:$0x1] %vm30, %v29
    %s33 = scalar_lea.vmem %s1, 33
    %34 = vst.msk [vmem:[%s33] sm:$0x2] %vm30, %v29
    %s35 = scalar_lea.vmem %s1, 64
    %36 = vst.msk [vmem:[%s35] sm:$0x4] %vm30, %v29
    %s37 = scalar_lea.vmem %s1, 95
    %38 = vst.msk [vmem:[%s37] sm:$0x8] %vm30, %v29
    %v39 = vld [vmem:[#allocation0] sm:$0xf]
    %40 = vrot.lane.b32.xlu0 %v39, 125
    %v41 = vpop.permute.xlu0 %40
    %vm42 = vcmask 7168
    %s43 = scalar_lea.vmem %s1, 3
    %44 = vst.msk [vmem:[%s43] sm:$0x1] %vm42, %v41
    %s45 = scalar_lea.vmem %s1, 34
    %46 = vst.msk [vmem:[%s45] sm:$0x2] %vm42, %v41
    %s47 = scalar_lea.vmem %s1, 65
    %48 = vst.msk [vmem:[%s47] sm:$0x4] %vm42, %v41
    %s49 = scalar_lea.vmem %s1, 96
    %50 = vst.msk [vmem:[%s49] sm:$0x8] %vm42, %v41
    %v51 = vld [vmem:[#allocation0] sm:$0xf]
    %52 = vrot.lane.b32.xlu0 %v51, 124
    %v53 = vpop.permute.xlu0 %52
    %vm54 = vcmask 7168
    %s55 = scalar_lea.vmem %s1, 4
    %56 = vst.msk [vmem:[%s55] sm:$0x1] %vm54, %v53
    %s57 = scalar_lea.vmem %s1, 35
    %58 = vst.msk [vmem:[%s57] sm:$0x2] %vm54, %v53
    %s59 = scalar_lea.vmem %s1, 66
    %60 = vst.msk [vmem:[%s59] sm:$0x4] %vm54, %v53
    %s61 = scalar_lea.vmem %s1, 97
    %62 = vst.msk [vmem:[%s61] sm:$0x8] %vm54, %v53
    %v63 = vld [vmem:[#allocation0] sm:$0xf]
    %64 = vrot.lane.b32.xlu0 %v63, 123
    %v65 = vpop.permute.xlu0 %64
    %vm66 = vcmask 7168
    %s67 = scalar_lea.vmem %s1, 5
    %68 = vst.msk [vmem:[%s67] sm:$0x1] %vm66, %v65
    %s69 = scalar_lea.vmem %s1, 36
    %70 = vst.msk [vmem:[%s69] sm:$0x2] %vm66, %v65
    %s71 = scalar_lea.vmem %s1, 67
    %72 = vst.msk [vmem:[%s71] sm:$0x4] %vm66, %v65
    %s73 = scalar_lea.vmem %s1, 98
    %74 = vst.msk [vmem:[%s73] sm:$0x8] %vm66, %v65
    %v75 = vld [vmem:[#allocation0] sm:$0xf]
    %76 = vrot.lane.b32.xlu0 %v75, 122
    %v77 = vpop.permute.xlu0 %76
    %vm78 = vcmask 7168
    %s79 = scalar_lea.vmem %s1, 6
    %80 = vst.msk [vmem:[%s79] sm:$0x1] %vm78, %v77
    %s81 = scalar_lea.vmem %s1, 37
    %82 = vst.msk [vmem:[%s81] sm:$0x2] %vm78, %v77
    %s83 = scalar_lea.vmem %s1, 68
    %84 = vst.msk [vmem:[%s83] sm:$0x4] %vm78, %v77
    %s85 = scalar_lea.vmem %s1, 99
    %86 = vst.msk [vmem:[%s85] sm:$0x8] %vm78, %v77
    %v87 = vld [vmem:[#allocation0] sm:$0xf]
    %88 = vrot.lane.b32.xlu0 %v87, 121
    %v89 = vpop.permute.xlu0 %88
    %vm90 = vcmask 7168
    %s91 = scalar_lea.vmem %s1, 7
    %92 = vst.msk [vmem:[%s91] sm:$0x1] %vm90, %v89
    %s93 = scalar_lea.vmem %s1, 38
    %94 = vst.msk [vmem:[%s93] sm:$0x2] %vm90, %v89
    %s95 = scalar_lea.vmem %s1, 69
    %96 = vst.msk [vmem:[%s95] sm:$0x4] %vm90, %v89
    %s97 = scalar_lea.vmem %s1, 100
    %98 = vst.msk [vmem:[%s97] sm:$0x8] %vm90, %v89
    %v99 = vld [vmem:[#allocation0] sm:$0xf]
    %100 = vrot.lane.b32.xlu0 %v99, 120
    %v101 = vpop.permute.xlu0 %100
    %vm102 = vcmask 7168
    %s103 = scalar_lea.vmem %s1, 8
    %104 = vst.msk [vmem:[%s103] sm:$0x1] %vm102, %v101
    %s105 = scalar_lea.vmem %s1, 39
    %106 = vst.msk [vmem:[%s105] sm:$0x2] %vm102, %v101
    %s107 = scalar_lea.vmem %s1, 70
    %108 = vst.msk [vmem:[%s107] sm:$0x4] %vm102, %v101
    %s109 = scalar_lea.vmem %s1, 101
    %110 = vst.msk [vmem:[%s109] sm:$0x8] %vm102, %v101
    %v111 = vld [vmem:[#allocation0] sm:$0xf]
    %112 = vrot.lane.b32.xlu0 %v111, 119
    %v113 = vpop.permute.xlu0 %112
    %vm114 = vcmask 7168
    %s115 = scalar_lea.vmem %s1, 9
    %116 = vst.msk [vmem:[%s115] sm:$0x1] %vm114, %v113
    %s117 = scalar_lea.vmem %s1, 40
    %118 = vst.msk [vmem:[%s117] sm:$0x2] %vm114, %v113
    %s119 = scalar_lea.vmem %s1, 71
    %120 = vst.msk [vmem:[%s119] sm:$0x4] %vm114, %v113
    %s121 = scalar_lea.vmem %s1, 102
    %122 = vst.msk [vmem:[%s121] sm:$0x8] %vm114, %v113
    %v123 = vld [vmem:[#allocation0] sm:$0xf]
    %124 = vrot.lane.b32.xlu0 %v123, 118
    %v125 = vpop.permute.xlu0 %124
    %vm126 = vcmask 7168
    %s127 = scalar_lea.vmem %s1, 10
    %128 = vst.msk [vmem:[%s127] sm:$0x1] %vm126, %v125
    %s129 = scalar_lea.vmem %s1, 41
    %130 = vst.msk [vmem:[%s129] sm:$0x2] %vm126, %v125
    %s131 = scalar_lea.vmem %s1, 72
    %132 = vst.msk [vmem:[%s131] sm:$0x4] %vm126, %v125
    %s133 = scalar_lea.vmem %s1, 103
    %134 = vst.msk [vmem:[%s133] sm:$0x8] %vm126, %v125
    %v135 = vld [vmem:[#allocation0] sm:$0xf]
    %136 = vrot.lane.b32.xlu0 %v135, 117
    %v137 = vpop.permute.xlu0 %136
    %vm138 = vcmask 7168
    %s139 = scalar_lea.vmem %s1, 11
    %140 = vst.msk [vmem:[%s139] sm:$0x1] %vm138, %v137
    %s141 = scalar_lea.vmem %s1, 42
    %142 = vst.msk [vmem:[%s141] sm:$0x2] %vm138, %v137
    %s143 = scalar_lea.vmem %s1, 73
    %144 = vst.msk [vmem:[%s143] sm:$0x4] %vm138, %v137
    %s145 = scalar_lea.vmem %s1, 104
    %146 = vst.msk [vmem:[%s145] sm:$0x8] %vm138, %v137
    %v147 = vld [vmem:[#allocation0] sm:$0xf]
    %148 = vrot.lane.b32.xlu0 %v147, 116
    %v149 = vpop.permute.xlu0 %148
    %vm150 = vcmask 7168
    %s151 = scalar_lea.vmem %s1, 12
    %152 = vst.msk [vmem:[%s151] sm:$0x1] %vm150, %v149
    %s153 = scalar_lea.vmem %s1, 43
    %154 = vst.msk [vmem:[%s153] sm:$0x2] %vm150, %v149
    %s155 = scalar_lea.vmem %s1, 74
    %156 = vst.msk [vmem:[%s155] sm:$0x4] %vm150, %v149
    %s157 = scalar_lea.vmem %s1, 105
    %158 = vst.msk [vmem:[%s157] sm:$0x8] %vm150, %v149
    %v159 = vld [vmem:[#allocation0] sm:$0xf]
    %160 = vrot.lane.b32.xlu0 %v159, 115
    %v161 = vpop.permute.xlu0 %160
    %vm162 = vcmask 7168
    %s163 = scalar_lea.vmem %s1, 13
    %164 = vst.msk [vmem:[%s163] sm:$0x1] %vm162, %v161
    %s165 = scalar_lea.vmem %s1, 44
    %166 = vst.msk [vmem:[%s165] sm:$0x2] %vm162, %v161
    %s167 = scalar_lea.vmem %s1, 75
    %168 = vst.msk [vmem:[%s167] sm:$0x4] %vm162, %v161
    %s169 = scalar_lea.vmem %s1, 106
    %170 = vst.msk [vmem:[%s169] sm:$0x8] %vm162, %v161
    %v171 = vld [vmem:[#allocation0] sm:$0xf]
    %172 = vrot.lane.b32.xlu0 %v171, 114
    %v173 = vpop.permute.xlu0 %172
    %vm174 = vcmask 7168
    %s175 = scalar_lea.vmem %s1, 14
    %176 = vst.msk [vmem:[%s175] sm:$0x1] %vm174, %v173
    %s177 = scalar_lea.vmem %s1, 45
    %178 = vst.msk [vmem:[%s177] sm:$0x2] %vm174, %v173
    %s179 = scalar_lea.vmem %s1, 76
    %180 = vst.msk [vmem:[%s179] sm:$0x4] %vm174, %v173
    %s181 = scalar_lea.vmem %s1, 107
    %182 = vst.msk [vmem:[%s181] sm:$0x8] %vm174, %v173
    %v183 = vld [vmem:[#allocation0] sm:$0xf]
    %184 = vrot.lane.b32.xlu0 %v183, 113
    %v185 = vpop.permute.xlu0 %184
    %vm186 = vcmask 7168
    %s187 = scalar_lea.vmem %s1, 15
    %188 = vst.msk [vmem:[%s187] sm:$0x1] %vm186, %v185
    %s189 = scalar_lea.vmem %s1, 46
    %190 = vst.msk [vmem:[%s189] sm:$0x2] %vm186, %v185
    %s191 = scalar_lea.vmem %s1, 77
    %192 = vst.msk [vmem:[%s191] sm:$0x4] %vm186, %v185
    %s193 = scalar_lea.vmem %s1, 108
    %194 = vst.msk [vmem:[%s193] sm:$0x8] %vm186, %v185
    %v195 = vld [vmem:[#allocation0] sm:$0xf]
    %196 = vrot.lane.b32.xlu0 %v195, 112
    %v197 = vpop.permute.xlu0 %196
    %vm198 = vcmask 7168
    %s199 = scalar_lea.vmem %s1, 16
    %200 = vst.msk [vmem:[%s199] sm:$0x1] %vm198, %v197
    %s201 = scalar_lea.vmem %s1, 47
    %202 = vst.msk [vmem:[%s201] sm:$0x2] %vm198, %v197
    %s203 = scalar_lea.vmem %s1, 78
    %204 = vst.msk [vmem:[%s203] sm:$0x4] %vm198, %v197
    %s205 = scalar_lea.vmem %s1, 109
    %206 = vst.msk [vmem:[%s205] sm:$0x8] %vm198, %v197
    %v207 = vld [vmem:[#allocation0] sm:$0xf]
    %208 = vrot.lane.b32.xlu0 %v207, 111
    %v209 = vpop.permute.xlu0 %208
    %vm210 = vcmask 7168
    %s211 = scalar_lea.vmem %s1, 17
    %212 = vst.msk [vmem:[%s211] sm:$0x1] %vm210, %v209
    %s213 = scalar_lea.vmem %s1, 48
    %214 = vst.msk [vmem:[%s213] sm:$0x2] %vm210, %v209
    %s215 = scalar_lea.vmem %s1, 79
    %216 = vst.msk [vmem:[%s215] sm:$0x4] %vm210, %v209
    %s217 = scalar_lea.vmem %s1, 110
    %218 = vst.msk [vmem:[%s217] sm:$0x8] %vm210, %v209
    %v219 = vld [vmem:[#allocation0] sm:$0xf]
    %220 = vrot.lane.b32.xlu0 %v219, 110
    %v221 = vpop.permute.xlu0 %220
    %vm222 = vcmask 7168
    %s223 = scalar_lea.vmem %s1, 18
    %224 = vst.msk [vmem:[%s223] sm:$0x1] %vm222, %v221
    %s225 = scalar_lea.vmem %s1, 49
    %226 = vst.msk [vmem:[%s225] sm:$0x2] %vm222, %v221
    %s227 = scalar_lea.vmem %s1, 80
    %228 = vst.msk [vmem:[%s227] sm:$0x4] %vm222, %v221
    %s229 = scalar_lea.vmem %s1, 111
    %230 = vst.msk [vmem:[%s229] sm:$0x8] %vm222, %v221
    %v231 = vld [vmem:[#allocation0] sm:$0xf]
    %232 = vrot.lane.b32.xlu0 %v231, 109
    %v233 = vpop.permute.xlu0 %232
    %vm234 = vcmask 7168
    %s235 = scalar_lea.vmem %s1, 19
    %236 = vst.msk [vmem:[%s235] sm:$0x1] %vm234, %v233
    %s237 = scalar_lea.vmem %s1, 50
    %238 = vst.msk [vmem:[%s237] sm:$0x2] %vm234, %v233
    %s239 = scalar_lea.vmem %s1, 81
    %240 = vst.msk [vmem:[%s239] sm:$0x4] %vm234, %v233
    %s241 = scalar_lea.vmem %s1, 112
    %242 = vst.msk [vmem:[%s241] sm:$0x8] %vm234, %v233
    %v243 = vld [vmem:[#allocation0] sm:$0xf]
    %244 = vrot.lane.b32.xlu0 %v243, 108
    %v245 = vpop.permute.xlu0 %244
    %vm246 = vcmask 7168
    %s247 = scalar_lea.vmem %s1, 20
    %248 = vst.msk [vmem:[%s247] sm:$0x1] %vm246, %v245
    %s249 = scalar_lea.vmem %s1, 51
    %250 = vst.msk [vmem:[%s249] sm:$0x2] %vm246, %v245
    %s251 = scalar_lea.vmem %s1, 82
    %252 = vst.msk [vmem:[%s251] sm:$0x4] %vm246, %v245
    %s253 = scalar_lea.vmem %s1, 113
    %254 = vst.msk [vmem:[%s253] sm:$0x8] %vm246, %v245
    %v255 = vld [vmem:[#allocation0] sm:$0xf]
    %256 = vrot.lane.b32.xlu0 %v255, 107
    %v257 = vpop.permute.xlu0 %256
    %vm258 = vcmask 7168
    %s259 = scalar_lea.vmem %s1, 21
    %260 = vst.msk [vmem:[%s259] sm:$0x1] %vm258, %v257
    %s261 = scalar_lea.vmem %s1, 52
    %262 = vst.msk [vmem:[%s261] sm:$0x2] %vm258, %v257
    %s263 = scalar_lea.vmem %s1, 83
    %264 = vst.msk [vmem:[%s263] sm:$0x4] %vm258, %v257
    %s265 = scalar_lea.vmem %s1, 114
    %266 = vst.msk [vmem:[%s265] sm:$0x8] %vm258, %v257
    %v267 = vld [vmem:[#allocation0] sm:$0xf]
    %268 = vrot.lane.b32.xlu0 %v267, 106
    %v269 = vpop.permute.xlu0 %268
    %vm270 = vcmask 7168
    %s271 = scalar_lea.vmem %s1, 22
    %272 = vst.msk [vmem:[%s271] sm:$0x1] %vm270, %v269
    %s273 = scalar_lea.vmem %s1, 53
    %274 = vst.msk [vmem:[%s273] sm:$0x2] %vm270, %v269
    %s275 = scalar_lea.vmem %s1, 84
    %276 = vst.msk [vmem:[%s275] sm:$0x4] %vm270, %v269
    %s277 = scalar_lea.vmem %s1, 115
    %278 = vst.msk [vmem:[%s277] sm:$0x8] %vm270, %v269
    %v279 = vld [vmem:[#allocation0] sm:$0xf]
    %280 = vrot.lane.b32.xlu0 %v279, 105
    %v281 = vpop.permute.xlu0 %280
    %vm282 = vcmask 7168
    %s283 = scalar_lea.vmem %s1, 23
    %284 = vst.msk [vmem:[%s283] sm:$0x1] %vm282, %v281
    %s285 = scalar_lea.vmem %s1, 54
    %286 = vst.msk [vmem:[%s285] sm:$0x2] %vm282, %v281
    %s287 = scalar_lea.vmem %s1, 85
    %288 = vst.msk [vmem:[%s287] sm:$0x4] %vm282, %v281
    %s289 = scalar_lea.vmem %s1, 116
    %290 = vst.msk [vmem:[%s289] sm:$0x8] %vm282, %v281
    %v291 = vld [vmem:[#allocation0] sm:$0xf]
    %292 = vrot.lane.b32.xlu0 %v291, 104
    %v293 = vpop.permute.xlu0 %292
    %vm294 = vcmask 7168
    %s295 = scalar_lea.vmem %s1, 24
    %296 = vst.msk [vmem:[%s295] sm:$0x1] %vm294, %v293
    %s297 = scalar_lea.vmem %s1, 55
    %298 = vst.msk [vmem:[%s297] sm:$0x2] %vm294, %v293
    %s299 = scalar_lea.vmem %s1, 86
    %300 = vst.msk [vmem:[%s299] sm:$0x4] %vm294, %v293
    %s301 = scalar_lea.vmem %s1, 117
    %302 = vst.msk [vmem:[%s301] sm:$0x8] %vm294, %v293
    %v303 = vld [vmem:[#allocation0] sm:$0xf]
    %304 = vrot.lane.b32.xlu0 %v303, 103
    %v305 = vpop.permute.xlu0 %304
    %vm306 = vcmask 7168
    %s307 = scalar_lea.vmem %s1, 25
    %308 = vst.msk [vmem:[%s307] sm:$0x1] %vm306, %v305
    %s309 = scalar_lea.vmem %s1, 56
    %310 = vst.msk [vmem:[%s309] sm:$0x2] %vm306, %v305
    %s311 = scalar_lea.vmem %s1, 87
    %312 = vst.msk [vmem:[%s311] sm:$0x4] %vm306, %v305
    %s313 = scalar_lea.vmem %s1, 118
    %314 = vst.msk [vmem:[%s313] sm:$0x8] %vm306, %v305
    %v315 = vld [vmem:[#allocation0] sm:$0xf]
    %316 = vrot.lane.b32.xlu0 %v315, 102
    %v317 = vpop.permute.xlu0 %316
    %vm318 = vcmask 7168
    %s319 = scalar_lea.vmem %s1, 26
    %320 = vst.msk [vmem:[%s319] sm:$0x1] %vm318, %v317
    %s321 = scalar_lea.vmem %s1, 57
    %322 = vst.msk [vmem:[%s321] sm:$0x2] %vm318, %v317
    %s323 = scalar_lea.vmem %s1, 88
    %324 = vst.msk [vmem:[%s323] sm:$0x4] %vm318, %v317
    %s325 = scalar_lea.vmem %s1, 119
    %326 = vst.msk [vmem:[%s325] sm:$0x8] %vm318, %v317
    %v327 = vld [vmem:[#allocation0] sm:$0xf]
    %328 = vrot.lane.b32.xlu0 %v327, 101
    %v329 = vpop.permute.xlu0 %328
    %vm330 = vcmask 7168
    %s331 = scalar_lea.vmem %s1, 27
    %332 = vst.msk [vmem:[%s331] sm:$0x1] %vm330, %v329
    %s333 = scalar_lea.vmem %s1, 58
    %334 = vst.msk [vmem:[%s333] sm:$0x2] %vm330, %v329
    %s335 = scalar_lea.vmem %s1, 89
    %336 = vst.msk [vmem:[%s335] sm:$0x4] %vm330, %v329
    %s337 = scalar_lea.vmem %s1, 120
    %338 = vst.msk [vmem:[%s337] sm:$0x8] %vm330, %v329
    %v339 = vld [vmem:[#allocation0] sm:$0xf]
    %340 = vrot.lane.b32.xlu0 %v339, 100
    %v341 = vpop.permute.xlu0 %340
    %vm342 = vcmask 7168
    %s343 = scalar_lea.vmem %s1, 28
    %344 = vst.msk [vmem:[%s343] sm:$0x1] %vm342, %v341
    %s345 = scalar_lea.vmem %s1, 59
    %346 = vst.msk [vmem:[%s345] sm:$0x2] %vm342, %v341
    %s347 = scalar_lea.vmem %s1, 90
    %348 = vst.msk [vmem:[%s347] sm:$0x4] %vm342, %v341
    %s349 = scalar_lea.vmem %s1, 121
    %350 = vst.msk [vmem:[%s349] sm:$0x8] %vm342, %v341
    %v351 = vld [vmem:[#allocation0] sm:$0xf]
    %352 = vrot.lane.b32.xlu0 %v351, 99
    %v353 = vpop.permute.xlu0 %352
    %vm354 = vcmask 7168
    %s355 = scalar_lea.vmem %s1, 29
    %356 = vst.msk [vmem:[%s355] sm:$0x1] %vm354, %v353
    %s357 = scalar_lea.vmem %s1, 60
    %358 = vst.msk [vmem:[%s357] sm:$0x2] %vm354, %v353
    %s359 = scalar_lea.vmem %s1, 91
    %360 = vst.msk [vmem:[%s359] sm:$0x4] %vm354, %v353
    %s361 = scalar_lea.vmem %s1, 122
    %362 = vst.msk [vmem:[%s361] sm:$0x8] %vm354, %v353
    %v363 = vld [vmem:[#allocation0] sm:$0xf]
    %364 = vrot.lane.b32.xlu0 %v363, 98
    %v365 = vpop.permute.xlu0 %364
    %vm366 = vcmask 7168
    %s367 = scalar_lea.vmem %s1, 30
    %368 = vst.msk [vmem:[%s367] sm:$0x1] %vm366, %v365
    %s369 = scalar_lea.vmem %s1, 61
    %370 = vst.msk [vmem:[%s369] sm:$0x2] %vm366, %v365
    %s371 = scalar_lea.vmem %s1, 92
    %372 = vst.msk [vmem:[%s371] sm:$0x4] %vm366, %v365
    %s373 = scalar_lea.vmem %s1, 123
    %374 = vst.msk [vmem:[%s373] sm:$0x8] %vm366, %v365
    %v375 = vld [vmem:[#allocation0] sm:$0xf]
    %376 = vrot.lane.b32.xlu0 %v375, 97
    %v377 = vpop.permute.xlu0 %376
    %vm378 = vcmask 7168
    %s379 = scalar_lea.vmem %s1, 31
    %380 = vst.msk [vmem:[%s379] sm:$0x1] %vm378, %v377
    %s381 = scalar_lea.vmem %s1, 62
    %382 = vst.msk [vmem:[%s381] sm:$0x2] %vm378, %v377
    %s383 = scalar_lea.vmem %s1, 93
    %384 = vst.msk [vmem:[%s383] sm:$0x4] %vm378, %v377
    %s385 = scalar_lea.vmem %s1, 124
    %386 = vst.msk [vmem:[%s385] sm:$0x8] %vm378, %v377

// kernel: _up_forward.1
$region0: #{_up_forward.1}
  #allocation0 [shape = 'u32[]', space=smem, size = 0x4, offset = 0x4, fixed_abs, tag = 'smem constant byte address 0x4 - core index']
  #allocation1 [shape = 'u32[144,128]{1,0:T(1,128)}', space=vmem, size = 0x12000, scoped, tag = 'internal scratch']
  %s0 = inlined_call_operand.vmem [shape: f32[2,64,1024], index: 0, kind: input, shape index: {}]
  %s1 = inlined_call_operand.vmem [shape: bf16[128,64], index: 1, kind: input, shape index: {}]
  %s2 = inlined_call_operand.vmem [shape: f32[128,1], index: 2, kind: input, shape index: {}]
  %s3 = inlined_call_operand.vmem [shape: f32[2,128,1024], index: 3, kind: input, shape index: {}, may-alias: {3,4}]
  %s4 = inlined_call_operand.vmem [shape: f32[2,128,1024], index: 4, kind: output, shape index: {}, may-alias: {3,4}]
  %s5 = sld [smem:[#allocation0]]
  $region114: #{_up_forward.1} parent=0
    _
  %s7 = ssub.s32 1, %s5
  %s8 = scalar_select 0, %s7, %s5
  $region1: #{_up_forward.1} parent=0
    #allocation2 [shape = 'u8[262144]{0}', space=vmem, size = 0x40000, scoped, tag = 'input window, operand 0']
    #allocation3 [shape = 'u8[524288]{0}', space=vmem, size = 0x80000, scoped, tag = 'input window, operand 3']
    #allocation4 [shape = 'u8[524288]{0}', space=vmem, size = 0x80000, scoped, tag = 'output window, operand 0']
    loop: start=0, step=1, limit=6
    $region2: #{_up_forward.1} parent=1 // loop_pre_header
      _
    $region3: #{_up_forward.1} parent=1 // loop_header
      %s10 = sphi 0, %s14
      %p11 = scmp.ge.s32.totalorder %s10, 6
      %s17 = sphi 0, %s29
      %s18 = sphi 0, %s25
      %s19 = sphi 0, %s17
      %s20 = sphi 0, %s18
      %s21 = sphi 0, %s19
      %s22 = sphi 0, %s20
      %s34 = sphi 0, %s36
      %s37 = sphi 0, %s34
      %s38 = sphi 0, %s37
      %s54 = sphi 0, %s38
      %s58 = sphi 0, %s58
      %s60 = sphi 0, %s58
      %s61 = sphi 0, %s60
      %s75 = sphi 0, %s61
      %s79 = sphi 0, %s79
      %s81 = sphi 0, %s79
      %s82 = sphi 0, %s81
      %s96 = sphi 0, %s82
      %s104 = sphi 0, %s106
      %s107 = sphi 0, %s104
      %s108 = sphi 0, %s107
      %s124 = sphi 0, %s108
      %s132 = sphi 0, %s134
      %s135 = sphi 0, %s132
      %s136 = sphi 0, %s135
      %s152 = sphi 0, %s136
    $region4: #{_up_forward.1} parent=1 // loop_header_branch
      %13 = sbr.rel (%p11) target = $region8
    $region5: #{_up_forward.1} parent=1 // loop_body
      %s15 = ssub.s32 %s10, 1
      %s16 = ssub.s32 %s10, 2
      %s23 = sadd.s32 1, %s18
      %p24 = scmp.ge.s32.totalorder %s23, 2
      %s25 = scalar_select %p24, 0, %s23
      %s26 = sadd.s32 1, %s17
      %s27 = scalar_select %p24, %s26, %s17
      %p28 = scmp.ge.s32.totalorder %s27, 2
      %s29 = scalar_select %p28, 0, %s27
      %s30 = ssub.s32 %s17, %s29
      %s31 = ssub.s32 %s18, %s25
      %s32 = sor.u32 %s30, %s31
      %p33 = scmp.eq.s32.totalorder %s32, 0
      %s35 = sadd.s32 %s34, 1
      %s36 = scalar_select %p33, %s34, %s35
      %p39 = pneg %p33
      %p40 = scmp.eq.s32.totalorder %s10, 3
      %p41 = por %p39, %p40
      %p42 = scmp.ne.s32.totalorder %s34, %s37
      %p43 = scmp.eq.s32.totalorder %s10, 0
      %p44 = por %p42, %p43
      %p45 = scmp.ne.s32.totalorder %s34, %s37
      %p46 = scmp.eq.s32.totalorder %s15, 3
      %p47 = por %p45, %p46
      %p48 = scmp.ne.s32.totalorder %s37, %s38
      %p49 = scmp.eq.s32.totalorder %s15, 0
      %p50 = por %p48, %p49
      %p51 = scmp.ne.s32.totalorder %s37, %s38
      %p52 = scmp.eq.s32.totalorder %s16, 3
      %p53 = por %p51, %p52
      %p55 = scmp.ne.s32.totalorder %s38, %s54
      %p56 = scmp.eq.s32.totalorder %s16, 0
      %p57 = por %p55, %p56
      %s59 = sadd.s32 %s58, 1
      %p62 = scmp.eq.s32.totalorder %s10, 3
      %p63 = scmp.ne.s32.totalorder %s58, %s60
      %p64 = scmp.eq.s32.totalorder %s10, 0
      %p65 = por %p63, %p64
      %p66 = scmp.ne.s32.totalorder %s58, %s60
      %p67 = scmp.eq.s32.totalorder %s15, 3
      %p68 = por %p66, %p67
      %p69 = scmp.ne.s32.totalorder %s60, %s61
      %p70 = scmp.eq.s32.totalorder %s15, 0
      %p71 = por %p69, %p70
      %p72 = scmp.ne.s32.totalorder %s60, %s61
      %p73 = scmp.eq.s32.totalorder %s16, 3
      %p74 = por %p72, %p73
      %p76 = scmp.ne.s32.totalorder %s61, %s75
      %p77 = scmp.eq.s32.totalorder %s16, 0
      %p78 = por %p76, %p77
      %s80 = sadd.s32 %s79, 1
      %p83 = scmp.eq.s32.totalorder %s10, 3
      %p84 = scmp.ne.s32.totalorder %s79, %s81
      %p85 = scmp.eq.s32.totalorder %s10, 0
      %p86 = por %p84, %p85
      %p87 = scmp.ne.s32.totalorder %s79, %s81
      %p88 = scmp.eq.s32.totalorder %s15, 3
      %p89 = por %p87, %p88
      %p90 = scmp.ne.s32.totalorder %s81, %s82
      %p91 = scmp.eq.s32.totalorder %s15, 0
      %p92 = por %p90, %p91
      %p93 = scmp.ne.s32.totalorder %s81, %s82
      %p94 = scmp.eq.s32.totalorder %s16, 3
      %p95 = por %p93, %p94
      %p97 = scmp.ne.s32.totalorder %s82, %s96
      %p98 = scmp.eq.s32.totalorder %s16, 0
      %p99 = por %p97, %p98
      %s100 = ssub.s32 %s17, %s29
      %s101 = ssub.s32 %s18, %s25
      %s102 = sor.u32 %s100, %s101
      %p103 = scmp.eq.s32.totalorder %s102, 0
      %s105 = sadd.s32 %s104, 1
      %s106 = scalar_select %p103, %s104, %s105
      %p109 = pneg %p103
      %p110 = scmp.eq.s32.totalorder %s10, 3
      %p111 = por %p109, %p110
      %p112 = scmp.ne.s32.totalorder %s104, %s107
      %p113 = scmp.eq.s32.totalorder %s10, 0
      %p114 = por %p112, %p113
      %p115 = scmp.ne.s32.totalorder %s104, %s107
      %p116 = scmp.eq.s32.totalorder %s15, 3
      %p117 = por %p115, %p116
      %p118 = scmp.ne.s32.totalorder %s107, %s108
      %p119 = scmp.eq.s32.totalorder %s15, 0
      %p120 = por %p118, %p119
      %p121 = scmp.ne.s32.totalorder %s107, %s108
      %p122 = scmp.eq.s32.totalorder %s16, 3
      %p123 = por %p121, %p122
      %p125 = scmp.ne.s32.totalorder %s108, %s124
      %p126 = scmp.eq.s32.totalorder %s16, 0
      %p127 = por %p125, %p126
      %s128 = ssub.s32 %s17, %s29
      %s129 = ssub.s32 %s18, %s25
      %s130 = sor.u32 %s128, %s129
      %p131 = scmp.eq.s32.totalorder %s130, 0
      %s133 = sadd.s32 %s132, 1
      %s134 = scalar_select %p131, %s132, %s133
      %p137 = pneg %p131
      %p138 = scmp.eq.s32.totalorder %s10, 3
      %p139 = por %p137, %p138
      %p140 = scmp.ne.s32.totalorder %s132, %s135
      %p141 = scmp.eq.s32.totalorder %s10, 0
      %p142 = por %p140, %p141
      %p143 = scmp.ne.s32.totalorder %s132, %s135
      %p144 = scmp.eq.s32.totalorder %s15, 3
      %p145 = por %p143, %p144
      %p146 = scmp.ne.s32.totalorder %s135, %s136
      %p147 = scmp.eq.s32.totalorder %s15, 0
      %p148 = por %p146, %p147
      %p149 = scmp.ne.s32.totalorder %s135, %s136
      %p150 = scmp.eq.s32.totalorder %s16, 3
      %p151 = por %p149, %p150
      %p153 = scmp.ne.s32.totalorder %s136, %s152
      %p154 = scmp.eq.s32.totalorder %s16, 0
      %p155 = por %p153, %p154
      %p156 = scmp.le.s32.totalorder 1, %s10
      %p157 = scmp.lt.s32.totalorder %s10, 5
      %p158 = pnand %p156, %p157
      %p159 = pneg %p158
      // Predicated region
      $region9: #{_up_forward.1} parent=5 // pred_check
        _
      $region10: #{_up_forward.1} parent=5 // pred_check_branch
        %161 = sbr.rel (%p158) target = $region12
      $region11: #{_up_forward.1} parent=5 // pred_region
        %s162 = ssub.s32 %s10, 1
        // Predicated region
        $region13: #{_up_forward.1} parent=11 // pred_check
          %p163 = pneg %p71
        $region14: #{_up_forward.1} parent=11 // pred_check_branch
          %165 = sbr.rel (%p163) target = $region16
        $region15: #{_up_forward.1} parent=11 // pred_region
          _
        $region16: #{_up_forward.1} parent=11 // pred_fallthru
          _
        // Predicated region
        $region17: #{_up_forward.1} parent=11 // pred_check
          %p166 = pneg %p92
        $region18: #{_up_forward.1} parent=11 // pred_check_branch
          %168 = sbr.rel (%p166) target = $region20
        $region19: #{_up_forward.1} parent=11 // pred_region
          _
        $region20: #{_up_forward.1} parent=11 // pred_fallthru
          _
      $region12: #{_up_forward.1} parent=5 // pred_fallthru
        _
      %p169 = scmp.lt.s32.totalorder %s10, 4
      // Predicated region
      $region21: #{_up_forward.1} parent=5 // pred_check
        %p170 = pneg %p169
      $region22: #{_up_forward.1} parent=5 // pred_check_branch
        %172 = sbr.rel (%p170) target = $region24
      $region23: #{_up_forward.1} parent=5 // pred_region
        // Predicated region
        $region25: #{_up_forward.1} parent=23 // pred_check
          %p173 = pneg %p44
        $region26: #{_up_forward.1} parent=23 // pred_check_branch
          %175 = sbr.rel (%p173) target = $region28
        $region27: #{_up_forward.1} parent=23 // pred_region
          %s176 = sand.u32 %s34, 1
          %s177 = sand.u32 %s34, 1
          %s178 = smul.addr %s177, 256
          %s179 = scalar_lea.vmem [#allocation2], %s178
          %s180 = smul.u32 4, %s18
          %s181 = smul.addr %s17, 64
          %s182 = sadd.s32 %s180, %s181
          %s183 = smul.addr %s182, 8
          %s184 = scalar_lea.vmem %s0, %s183
          // Predicated region
          $region29: #{_up_forward.1} parent=27 // pred_check
            _
          $region30: #{_up_forward.1} parent=27 // pred_check_branch
            %186 = sbr.rel (0) target = $region32
          $region31: #{_up_forward.1} parent=27 // pred_region
            // Predicated region
            $region33: #{_up_forward.1} parent=31 // pred_check
              _
            $region34: #{_up_forward.1} parent=31 // pred_check_branch
              %188 = sbr.rel (0) target = $region36
            $region35: #{_up_forward.1} parent=31 // pred_region
              loop: start=0, step=1, limit=1
              $region37: #{_up_forward.1} parent=35 // loop_pre_header
                _
              $region38: #{_up_forward.1} parent=35 // loop_header
                %s190 = sphi 0, %s194
                %p191 = scmp.ge.s32.totalorder %s190, 1
                %s195 = sphi %s184, %s184
                %s196 = sphi %s179, %s179
              $region39: #{_up_forward.1} parent=35 // loop_header_branch
                %193 = sbr.rel (%p191) target = $region43
              $region40: #{_up_forward.1} parent=35 // loop_body
                %v197 = vld [vmem:[%s195] sm:$0xff]
                %198 = vst [vmem:[%s196] sm:$0xff] %v197
                %v199 = vld [vmem:[%s195 + $0x8] sm:$0xff]
                %200 = vst [vmem:[%s196 + $0x8] sm:$0xff] %v199
                %v201 = vld [vmem:[%s195 + $0x10] sm:$0xff]
                %202 = vst [vmem:[%s196 + $0x10] sm:$0xff] %v201
                %v203 = vld [vmem:[%s195 + $0x18] sm:$0xff]
                %204 = vst [vmem:[%s196 + $0x18] sm:$0xff] %v203
                %v205 = vld [vmem:[%s195 + $0x40] sm:$0xff]
                %206 = vst [vmem:[%s196 + $0x20] sm:$0xff] %v205
                %v207 = vld [vmem:[%s195 + $0x48] sm:$0xff]
                %208 = vst [vmem:[%s196 + $0x28] sm:$0xff] %v207
                %v209 = vld [vmem:[%s195 + $0x50] sm:$0xff]
                %210 = vst [vmem:[%s196 + $0x30] sm:$0xff] %v209
                %v211 = vld [vmem:[%s195 + $0x58] sm:$0xff]
                %212 = vst [vmem:[%s196 + $0x38] sm:$0xff] %v211
                %v213 = vld [vmem:[%s195 + $0x80] sm:$0xff]
                %214 = vst [vmem:[%s196 + $0x40] sm:$0xff] %v213
                %v215 = vld [vmem:[%s195 + $0x88] sm:$0xff]
                %216 = vst [vmem:[%s196 + $0x48] sm:$0xff] %v215
                %v217 = vld [vmem:[%s195 + $0x90] sm:$0xff]
                %218 = vst [vmem:[%s196 + $0x50] sm:$0xff] %v217
                %v219 = vld [vmem:[%s195 + $0x98] sm:$0xff]
                %220 = vst [vmem:[%s196 + $0x58] sm:$0xff] %v219
                %v221 = vld [vmem:[%s195 + $0xc0] sm:$0xff]
                %222 = vst [vmem:[%s196 + $0x60] sm:$0xff] %v221
                %v223 = vld [vmem:[%s195 + $0xc8] sm:$0xff]
                %224 = vst [vmem:[%s196 + $0x68] sm:$0xff] %v223
                %v225 = vld [vmem:[%s195 + $0xd0] sm:$0xff]
                %226 = vst [vmem:[%s196 + $0x70] sm:$0xff] %v225
                %v227 = vld [vmem:[%s195 + $0xd8] sm:$0xff]
                %228 = vst [vmem:[%s196 + $0x78] sm:$0xff] %v227
                %v229 = vld [vmem:[%s195 + $0x100] sm:$0xff]
                %230 = vst [vmem:[%s196 + $0x80] sm:$0xff] %v229
                %v231 = vld [vmem:[%s195 + $0x108] sm:$0xff]
                %232 = vst [vmem:[%s196 + $0x88] sm:$0xff] %v231
                %v233 = vld [vmem:[%s195 + $0x110] sm:$0xff]
                %234 = vst [vmem:[%s196 + $0x90] sm:$0xff] %v233
                %v235 = vld [vmem:[%s195 + $0x118] sm:$0xff]
                %236 = vst [vmem:[%s196 + $0x98] sm:$0xff] %v235
                %v237 = vld [vmem:[%s195 + $0x140] sm:$0xff]
                %238 = vst [vmem:[%s196 + $0xa0] sm:$0xff] %v237
                %v239 = vld [vmem:[%s195 + $0x148] sm:$0xff]
                %240 = vst [vmem:[%s196 + $0xa8] sm:$0xff] %v239
                %v241 = vld [vmem:[%s195 + $0x150] sm:$0xff]
                %242 = vst [vmem:[%s196 + $0xb0] sm:$0xff] %v241
                %v243 = vld [vmem:[%s195 + $0x158] sm:$0xff]
                %244 = vst [vmem:[%s196 + $0xb8] sm:$0xff] %v243
                %v245 = vld [vmem:[%s195 + $0x180] sm:$0xff]
                %246 = vst [vmem:[%s196 + $0xc0] sm:$0xff] %v245
                %v247 = vld [vmem:[%s195 + $0x188] sm:$0xff]
                %248 = vst [vmem:[%s196 + $0xc8] sm:$0xff] %v247
                %v249 = vld [vmem:[%s195 + $0x190] sm:$0xff]
                %250 = vst [vmem:[%s196 + $0xd0] sm:$0xff] %v249
                %v251 = vld [vmem:[%s195 + $0x198] sm:$0xff]
                %252 = vst [vmem:[%s196 + $0xd8] sm:$0xff] %v251
                %v253 = vld [vmem:[%s195 + $0x1c0] sm:$0xff]
                %254 = vst [vmem:[%s196 + $0xe0] sm:$0xff] %v253
                %v255 = vld [vmem:[%s195 + $0x1c8] sm:$0xff]
                %256 = vst [vmem:[%s196 + $0xe8] sm:$0xff] %v255
                %v257 = vld [vmem:[%s195 + $0x1d0] sm:$0xff]
                %258 = vst [vmem:[%s196 + $0xf0] sm:$0xff] %v257
                %v259 = vld [vmem:[%s195 + $0x1d8] sm:$0xff]
                %260 = vst [vmem:[%s196 + $0xf8] sm:$0xff] %v259
              $region41: #{_up_forward.1} parent=35 // loop_footer
                %s194 = sadd.s32 1, %s190
              $region42: #{_up_forward.1} parent=35 // loop_footer_branch
                %189 = sbr.rel target = $region38
              $region43: #{_up_forward.1} parent=35 // loop_exit
                _
            $region36: #{_up_forward.1} parent=31 // pred_fallthru
              _
            // Predicated region
            $region44: #{_up_forward.1} parent=31 // pred_check
              _
            $region45: #{_up_forward.1} parent=31 // pred_check_branch
              %262 = sbr.rel target = $region47
            $region46: #{_up_forward.1} parent=31 // pred_region
              _
            $region47: #{_up_forward.1} parent=31 // pred_fallthru
              _
          $region32: #{_up_forward.1} parent=27 // pred_fallthru
            _
          %263 = vnop
        $region28: #{_up_forward.1} parent=23 // pred_fallthru
          _
        // Predicated region
        $region48: #{_up_forward.1} parent=23 // pred_check
          %p264 = pneg %p114
        $region49: #{_up_forward.1} parent=23 // pred_check_branch
          %266 = sbr.rel (%p264) target = $region51
        $region50: #{_up_forward.1} parent=23 // pred_region
          %s267 = sand.u32 %s104, 1
          %s268 = sand.u32 %s104, 1
          %s269 = smul.addr %s268, 512
          %s270 = scalar_lea.vmem [#allocation3], %s269
          %s271 = smul.u32 4, %s18
          %s272 = smul.addr %s17, 128
          %s273 = sadd.s32 %s271, %s272
          %s274 = smul.addr %s273, 8
          %s275 = scalar_lea.vmem %s3, %s274
          // Predicated region
          $region52: #{_up_forward.1} parent=50 // pred_check
            _
          $region53: #{_up_forward.1} parent=50 // pred_check_branch
            %277 = sbr.rel (0) target = $region55
          $region54: #{_up_forward.1} parent=50 // pred_region
            // Predicated region
            $region56: #{_up_forward.1} parent=54 // pred_check
              _
            $region57: #{_up_forward.1} parent=54 // pred_check_branch
              %279 = sbr.rel (0) target = $region59
            $region58: #{_up_forward.1} parent=54 // pred_region
              loop: start=0, step=1, limit=1
              $region60: #{_up_forward.1} parent=58 // loop_pre_header
                _
              $region61: #{_up_forward.1} parent=58 // loop_header
                %s281 = sphi 0, %s285
                %p282 = scmp.ge.s32.totalorder %s281, 1
                %s286 = sphi %s275, %s275
                %s287 = sphi %s270, %s270
              $region62: #{_up_forward.1} parent=58 // loop_header_branch
                %284 = sbr.rel (%p282) target = $region66
              $region63: #{_up_forward.1} parent=58 // loop_body
                %v288 = vld [vmem:[%s286] sm:$0xff]
                %289 = vst [vmem:[%s287] sm:$0xff] %v288
                %v290 = vld [vmem:[%s286 + $0x8] sm:$0xff]
                %291 = vst [vmem:[%s287 + $0x8] sm:$0xff] %v290
                %v292 = vld [vmem:[%s286 + $0x10] sm:$0xff]
                %293 = vst [vmem:[%s287 + $0x10] sm:$0xff] %v292
                %v294 = vld [vmem:[%s286 + $0x18] sm:$0xff]
                %295 = vst [vmem:[%s287 + $0x18] sm:$0xff] %v294
                %v296 = vld [vmem:[%s286 + $0x40] sm:$0xff]
                %297 = vst [vmem:[%s287 + $0x20] sm:$0xff] %v296
                %v298 = vld [vmem:[%s286 + $0x48] sm:$0xff]
                %299 = vst [vmem:[%s287 + $0x28] sm:$0xff] %v298
                %v300 = vld [vmem:[%s286 + $0x50] sm:$0xff]
                %301 = vst [vmem:[%s287 + $0x30] sm:$0xff] %v300
                %v302 = vld [vmem:[%s286 + $0x58] sm:$0xff]
                %303 = vst [vmem:[%s287 + $0x38] sm:$0xff] %v302
                %v304 = vld [vmem:[%s286 + $0x80] sm:$0xff]
                %305 = vst [vmem:[%s287 + $0x40] sm:$0xff] %v304
                %v306 = vld [vmem:[%s286 + $0x88] sm:$0xff]
                %307 = vst [vmem:[%s287 + $0x48] sm:$0xff] %v306
                %v308 = vld [vmem:[%s286 + $0x90] sm:$0xff]
                %309 = vst [vmem:[%s287 + $0x50] sm:$0xff] %v308
                %v310 = vld [vmem:[%s286 + $0x98] sm:$0xff]
                %311 = vst [vmem:[%s287 + $0x58] sm:$0xff] %v310
                %v312 = vld [vmem:[%s286 + $0xc0] sm:$0xff]
                %313 = vst [vmem:[%s287 + $0x60] sm:$0xff] %v312
                %v314 = vld [vmem:[%s286 + $0xc8] sm:$0xff]
                %315 = vst [vmem:[%s287 + $0x68] sm:$0xff] %v314
                %v316 = vld [vmem:[%s286 + $0xd0] sm:$0xff]
                %317 = vst [vmem:[%s287 + $0x70] sm:$0xff] %v316
                %v318 = vld [vmem:[%s286 + $0xd8] sm:$0xff]
                %319 = vst [vmem:[%s287 + $0x78] sm:$0xff] %v318
                %v320 = vld [vmem:[%s286 + $0x100] sm:$0xff]
                %321 = vst [vmem:[%s287 + $0x80] sm:$0xff] %v320
                %v322 = vld [vmem:[%s286 + $0x108] sm:$0xff]
                %323 = vst [vmem:[%s287 + $0x88] sm:$0xff] %v322
                %v324 = vld [vmem:[%s286 + $0x110] sm:$0xff]
                %325 = vst [vmem:[%s287 + $0x90] sm:$0xff] %v324
                %v326 = vld [vmem:[%s286 + $0x118] sm:$0xff]
                %327 = vst [vmem:[%s287 + $0x98] sm:$0xff] %v326
                %v328 = vld [vmem:[%s286 + $0x140] sm:$0xff]
                %329 = vst [vmem:[%s287 + $0xa0] sm:$0xff] %v328
                %v330 = vld [vmem:[%s286 + $0x148] sm:$0xff]
                %331 = vst [vmem:[%s287 + $0xa8] sm:$0xff] %v330
                %v332 = vld [vmem:[%s286 + $0x150] sm:$0xff]
                %333 = vst [vmem:[%s287 + $0xb0] sm:$0xff] %v332
                %v334 = vld [vmem:[%s286 + $0x158] sm:$0xff]
                %335 = vst [vmem:[%s287 + $0xb8] sm:$0xff] %v334
                %v336 = vld [vmem:[%s286 + $0x180] sm:$0xff]
                %337 = vst [vmem:[%s287 + $0xc0] sm:$0xff] %v336
                %v338 = vld [vmem:[%s286 + $0x188] sm:$0xff]
                %339 = vst [vmem:[%s287 + $0xc8] sm:$0xff] %v338
                %v340 = vld [vmem:[%s286 + $0x190] sm:$0xff]
                %341 = vst [vmem:[%s287 + $0xd0] sm:$0xff] %v340
                %v342 = vld [vmem:[%s286 + $0x198] sm:$0xff]
                %343 = vst [vmem:[%s287 + $0xd8] sm:$0xff] %v342
                %v344 = vld [vmem:[%s286 + $0x1c0] sm:$0xff]
                %345 = vst [vmem:[%s287 + $0xe0] sm:$0xff] %v344
                %v346 = vld [vmem:[%s286 + $0x1c8] sm:$0xff]
                %347 = vst [vmem:[%s287 + $0xe8] sm:$0xff] %v346
                %v348 = vld [vmem:[%s286 + $0x1d0] sm:$0xff]
                %349 = vst [vmem:[%s287 + $0xf0] sm:$0xff] %v348
                %v350 = vld [vmem:[%s286 + $0x1d8] sm:$0xff]
                %351 = vst [vmem:[%s287 + $0xf8] sm:$0xff] %v350
                %v352 = vld [vmem:[%s286 + $0x200] sm:$0xff]
                %353 = vst [vmem:[%s287 + $0x100] sm:$0xff] %v352
                %v354 = vld [vmem:[%s286 + $0x208] sm:$0xff]
                %355 = vst [vmem:[%s287 + $0x108] sm:$0xff] %v354
                %v356 = vld [vmem:[%s286 + $0x210] sm:$0xff]
                %357 = vst [vmem:[%s287 + $0x110] sm:$0xff] %v356
                %v358 = vld [vmem:[%s286 + $0x218] sm:$0xff]
                %359 = vst [vmem:[%s287 + $0x118] sm:$0xff] %v358
                %v360 = vld [vmem:[%s286 + $0x240] sm:$0xff]
                %361 = vst [vmem:[%s287 + $0x120] sm:$0xff] %v360
                %v362 = vld [vmem:[%s286 + $0x248] sm:$0xff]
                %363 = vst [vmem:[%s287 + $0x128] sm:$0xff] %v362
                %v364 = vld [vmem:[%s286 + $0x250] sm:$0xff]
                %365 = vst [vmem:[%s287 + $0x130] sm:$0xff] %v364
                %v366 = vld [vmem:[%s286 + $0x258] sm:$0xff]
                %367 = vst [vmem:[%s287 + $0x138] sm:$0xff] %v366
                %v368 = vld [vmem:[%s286 + $0x280] sm:$0xff]
                %369 = vst [vmem:[%s287 + $0x140] sm:$0xff] %v368
                %v370 = vld [vmem:[%s286 + $0x288] sm:$0xff]
                %371 = vst [vmem:[%s287 + $0x148] sm:$0xff] %v370
                %v372 = vld [vmem:[%s286 + $0x290] sm:$0xff]
                %373 = vst [vmem:[%s287 + $0x150] sm:$0xff] %v372
                %v374 = vld [vmem:[%s286 + $0x298] sm:$0xff]
                %375 = vst [vmem:[%s287 + $0x158] sm:$0xff] %v374
                %v376 = vld [vmem:[%s286 + $0x2c0] sm:$0xff]
                %377 = vst [vmem:[%s287 + $0x160] sm:$0xff] %v376
                %v378 = vld [vmem:[%s286 + $0x2c8] sm:$0xff]
                %379 = vst [vmem:[%s287 + $0x168] sm:$0xff] %v378
                %v380 = vld [vmem:[%s286 + $0x2d0] sm:$0xff]
                %381 = vst [vmem:[%s287 + $0x170] sm:$0xff] %v380
                %v382 = vld [vmem:[%s286 + $0x2d8] sm:$0xff]
                %383 = vst [vmem:[%s287 + $0x178] sm:$0xff] %v382
                %v384 = vld [vmem:[%s286 + $0x300] sm:$0xff]
                %385 = vst [vmem:[%s287 + $0x180] sm:$0xff] %v384
                %v386 = vld [vmem:[%s286 + $0x308] sm:$0xff]
                %387 = vst [vmem:[%s287 + $0x188] sm:$0xff] %v386
                %v388 = vld [vmem:[%s286 + $0x310] sm:$0xff]
                %389 = vst [vmem:[%s287 + $0x190] sm:$0xff] %v388
                %v390 = vld [vmem:[%s286 + $0x318] sm:$0xff]
                %391 = vst [vmem:[%s287 + $0x198] sm:$0xff] %v390
                %v392 = vld [vmem:[%s286 + $0x340] sm:$0xff]
                %393 = vst [vmem:[%s287 + $0x1a0] sm:$0xff] %v392
                %v394 = vld [vmem:[%s286 + $0x348] sm:$0xff]
                %395 = vst [vmem:[%s287 + $0x1a8] sm:$0xff] %v394
                %v396 = vld [vmem:[%s286 + $0x350] sm:$0xff]
                %397 = vst [vmem:[%s287 + $0x1b0] sm:$0xff] %v396
                %v398 = vld [vmem:[%s286 + $0x358] sm:$0xff]
                %399 = vst [vmem:[%s287 + $0x1b8] sm:$0xff] %v398
                %v400 = vld [vmem:[%s286 + $0x380] sm:$0xff]
                %401 = vst [vmem:[%s287 + $0x1c0] sm:$0xff] %v400
                %v402 = vld [vmem:[%s286 + $0x388] sm:$0xff]
                %403 = vst [vmem:[%s287 + $0x1c8] sm:$0xff] %v402
                %v404 = vld [vmem:[%s286 + $0x390] sm:$0xff]
                %405 = vst [vmem:[%s287 + $0x1d0] sm:$0xff] %v404
                %v406 = vld [vmem:[%s286 + $0x398] sm:$0xff]
                %407 = vst [vmem:[%s287 + $0x1d8] sm:$0xff] %v406
                %v408 = vld [vmem:[%s286 + $0x3c0] sm:$0xff]
                %409 = vst [vmem:[%s287 + $0x1e0] sm:$0xff] %v408
                %v410 = vld [vmem:[%s286 + $0x3c8] sm:$0xff]
                %411 = vst [vmem:[%s287 + $0x1e8] sm:$0xff] %v410
                %v412 = vld [vmem:[%s286 + $0x3d0] sm:$0xff]
                %413 = vst [vmem:[%s287 + $0x1f0] sm:$0xff] %v412
                %v414 = vld [vmem:[%s286 + $0x3d8] sm:$0xff]
                %415 = vst [vmem:[%s287 + $0x1f8] sm:$0xff] %v414
              $region64: #{_up_forward.1} parent=58 // loop_footer
                %s285 = sadd.s32 1, %s281
              $region65: #{_up_forward.1} parent=58 // loop_footer_branch
                %280 = sbr.rel target = $region61
              $region66: #{_up_forward.1} parent=58 // loop_exit
                _
            $region59: #{_up_forward.1} parent=54 // pred_fallthru
              _
            // Predicated region
            $region67: #{_up_forward.1} parent=54 // pred_check
              _
            $region68: #{_up_forward.1} parent=54 // pred_check_branch
              %417 = sbr.rel target = $region70
            $region69: #{_up_forward.1} parent=54 // pred_region
              _
            $region70: #{_up_forward.1} parent=54 // pred_fallthru
              _
          $region55: #{_up_forward.1} parent=50 // pred_fallthru
            _
          %418 = vnop
        $region51: #{_up_forward.1} parent=23 // pred_fallthru
          _
      $region24: #{_up_forward.1} parent=5 // pred_fallthru
        _
      %p419 = scmp.le.s32.totalorder 1, %s10
      %p420 = scmp.lt.s32.totalorder %s10, 5
      %p421 = pnand %p419, %p420
      %p422 = pneg %p421
      // Predicated region
      $region71: #{_up_forward.1} parent=5 // pred_check
        _
      $region72: #{_up_forward.1} parent=5 // pred_check_branch
        %424 = sbr.rel (%p421) target = $region74
      $region73: #{_up_forward.1} parent=5 // pred_region
        %s425 = ssub.s32 %s10, 1
        %s426 = sand.u32 %s37, 1
        %s427 = sand.u32 %s37, 1
        %s428 = smul.addr %s427, 256
        %s429 = scalar_lea.vmem [#allocation2], %s428
        // Predicated region
        $region75: #{_up_forward.1} parent=73 // pred_check
          %p430 = pneg %p50
        $region76: #{_up_forward.1} parent=73 // pred_check_branch
          %432 = sbr.rel (%p430) target = $region78
        $region77: #{_up_forward.1} parent=73 // pred_region
          _
        $region78: #{_up_forward.1} parent=73 // pred_fallthru
          _
        %s433 = sand.u32 %s107, 1
        %s434 = sand.u32 %s107, 1
        %s435 = smul.addr %s434, 512
        %s436 = scalar_lea.vmem [#allocation3], %s435
        // Predicated region
        $region79: #{_up_forward.1} parent=73 // pred_check
          %p437 = pneg %p120
        $region80: #{_up_forward.1} parent=73 // pred_check_branch
          %439 = sbr.rel (%p437) target = $region82
        $region81: #{_up_forward.1} parent=73 // pred_region
          _
        $region82: #{_up_forward.1} parent=73 // pred_fallthru
          _
        %s440 = sand.u32 %s37, 1
        %s441 = sand.u32 %s37, 1
        %s442 = smul.addr %s441, 256
        %s443 = scalar_lea.vmem [#allocation2], %s442
        %p444 = pneg %p50
        %p445 = pneg %p47
        %p446 = pneg %p71
        %p447 = pneg %p68
        %p448 = pneg %p92
        %p449 = pneg %p89
        %s450 = sand.u32 %s107, 1
        %s451 = sand.u32 %s107, 1
        %s452 = smul.addr %s451, 512
        %s453 = scalar_lea.vmem [#allocation3], %s452
        %p454 = pneg %p120
        %p455 = pneg %p117
        %p456 = pneg %p148
        %p457 = pneg %p145
        %s458 = sand.u32 %s135, 1
        %s459 = sand.u32 %s135, 1
        %s460 = smul.addr %s459, 512
        %s461 = scalar_lea.vmem [#allocation4], %s460
        %s462 = smul.u32 4, %s20
        %s463 = smul.u32 4, %s20
        %s464 = smul.u32 4, %s20
        %v466 = vld [vmem:[%s429] sm:$0xff]
        %v467 = vld [vmem:[%s429 + $0x8] sm:$0xff]
        %v468 = vld [vmem:[%s429 + $0x10] sm:$0xff]
        %v469 = vld [vmem:[%s429 + $0x18] sm:$0xff]
        %v470 = vld [vmem:[%s429 + $0x20] sm:$0xff]
        %v471 = vld [vmem:[%s429 + $0x28] sm:$0xff]
        %v472 = vld [vmem:[%s429 + $0x30] sm:$0xff]
        %v473 = vld [vmem:[%s429 + $0x38] sm:$0xff]
        %v474 = vld [vmem:[%s429 + $0x40] sm:$0xff]
        %v475 = vld [vmem:[%s429 + $0x48] sm:$0xff]
        %v476 = vld [vmem:[%s429 + $0x50] sm:$0xff]
        %v477 = vld [vmem:[%s429 + $0x58] sm:$0xff]
        %v478 = vld [vmem:[%s429 + $0x60] sm:$0xff]
        %v479 = vld [vmem:[%s429 + $0x68] sm:$0xff]
        %v480 = vld [vmem:[%s429 + $0x70] sm:$0xff]
        %v481 = vld [vmem:[%s429 + $0x78] sm:$0xff]
        %v482 = vld [vmem:[%s429 + $0x80] sm:$0xff]
        %v483 = vld [vmem:[%s429 + $0x88] sm:$0xff]
        %v484 = vld [vmem:[%s429 + $0x90] sm:$0xff]
        %v485 = vld [vmem:[%s429 + $0x98] sm:$0xff]
        %v486 = vld [vmem:[%s429 + $0xa0] sm:$0xff]
        %v487 = vld [vmem:[%s429 + $0xa8] sm:$0xff]
        %v488 = vld [vmem:[%s429 + $0xb0] sm:$0xff]
        %v489 = vld [vmem:[%s429 + $0xb8] sm:$0xff]
        %v490 = vld [vmem:[%s429 + $0xc0] sm:$0xff]
        %v491 = vld [vmem:[%s429 + $0xc8] sm:$0xff]
        %v492 = vld [vmem:[%s429 + $0xd0] sm:$0xff]
        %v493 = vld [vmem:[%s429 + $0xd8] sm:$0xff]
        %v494 = vld [vmem:[%s429 + $0xe0] sm:$0xff]
        %v495 = vld [vmem:[%s429 + $0xe8] sm:$0xff]
        %v496 = vld [vmem:[%s429 + $0xf0] sm:$0xff]
        %v497 = vld [vmem:[%s429 + $0xf8] sm:$0xff]
        %v498 = vpack.c.bf16 %v470, %v466
        %v499 = vpack.c.bf16 %v471, %v467
        %v500 = vpack.c.bf16 %v472, %v468
        %v501 = vpack.c.bf16 %v473, %v469
        %v502 = vpack.c.bf16 %v478, %v474
        %v503 = vpack.c.bf16 %v479, %v475
        %v504 = vpack.c.bf16 %v480, %v476
        %v505 = vpack.c.bf16 %v481, %v477
        %v506 = vpack.c.bf16 %v486, %v482
        %v507 = vpack.c.bf16 %v487, %v483
        %v508 = vpack.c.bf16 %v488, %v484
        %v509 = vpack.c.bf16 %v489, %v485
        %v510 = vpack.c.bf16 %v494, %v490
        %v511 = vpack.c.bf16 %v495, %v491
        %v512 = vpack.c.bf16 %v496, %v492
        %v513 = vpack.c.bf16 %v497, %v493
        %v514 = vld [vmem:[%s1] sm:$0xf]
        %v515 = vld [vmem:[%s1 + $0x4] sm:$0xf]
        %v516 = vld [vmem:[%s1 + $0x8] sm:$0xf]
        %v517 = vld [vmem:[%s1 + $0xc] sm:$0xf]
        %v518 = vld [vmem:[%s1 + $0x10] sm:$0xf]
        %v519 = vld [vmem:[%s1 + $0x14] sm:$0xf]
        %v520 = vld [vmem:[%s1 + $0x18] sm:$0xf]
        %v521 = vld [vmem:[%s1 + $0x1c] sm:$0xf]
        %v522 = vld [vmem:[%s1 + $0x20] sm:$0xf]
        %v523 = vld [vmem:[%s1 + $0x24] sm:$0xf]
        %v524 = vld [vmem:[%s1 + $0x28] sm:$0xf]
        %v525 = vld [vmem:[%s1 + $0x2c] sm:$0xf]
        %v526 = vld [vmem:[%s1 + $0x30] sm:$0xf]
        %v527 = vld [vmem:[%s1 + $0x34] sm:$0xf]
        %v528 = vld [vmem:[%s1 + $0x38] sm:$0xf]
        %v529 = vld [vmem:[%s1 + $0x3c] sm:$0xf]
        %v530 = vld [vmem:[%s2] sm:$0xff]
        %v531 = vld [vmem:[%s2 + $0x8] sm:$0xff]
        %v532 = vld [vmem:[%s2 + $0x10] sm:$0xff]
        %v533 = vld [vmem:[%s2 + $0x18] sm:$0xff]
        %v534 = vld [vmem:[%s2 + $0x20] sm:$0xff]
        %v535 = vld [vmem:[%s2 + $0x28] sm:$0xff]
        %v536 = vld [vmem:[%s2 + $0x30] sm:$0xff]
        %v537 = vld [vmem:[%s2 + $0x38] sm:$0xff]
        %v538 = vld [vmem:[%s2 + $0x40] sm:$0xff]
        %v539 = vld [vmem:[%s2 + $0x48] sm:$0xff]
        %v540 = vld [vmem:[%s2 + $0x50] sm:$0xff]
        %v541 = vld [vmem:[%s2 + $0x58] sm:$0xff]
        %v542 = vld [vmem:[%s2 + $0x60] sm:$0xff]
        %v543 = vld [vmem:[%s2 + $0x68] sm:$0xff]
        %v544 = vld [vmem:[%s2 + $0x70] sm:$0xff]
        %v545 = vld [vmem:[%s2 + $0x78] sm:$0xff]
        %547 = vset.pattern.permute.xlu0 0
        %548 = vperm.xlu0 %547, %v530
        %v549 = vpop.permute.xlu0 %548
        %552 = vset.pattern.permute.xlu0 0
        %553 = vperm.xlu0 %552, %v531
        %v554 = vpop.permute.xlu0 %553
        %557 = vset.pattern.permute.xlu0 0
        %558 = vperm.xlu0 %557, %v532
        %v559 = vpop.permute.xlu0 %558
        %562 = vset.pattern.permute.xlu0 0
        %563 = vperm.xlu0 %562, %v533
        %v564 = vpop.permute.xlu0 %563
        %567 = vset.pattern.permute.xlu0 0
        %568 = vperm.xlu0 %567, %v534
        %v569 = vpop.permute.xlu0 %568
        %572 = vset.pattern.permute.xlu0 0
        %573 = vperm.xlu0 %572, %v535
        %v574 = vpop.permute.xlu0 %573
        %577 = vset.pattern.permute.xlu0 0
        %578 = vperm.xlu0 %577, %v536
        %v579 = vpop.permute.xlu0 %578
        %582 = vset.pattern.permute.xlu0 0
        %583 = vperm.xlu0 %582, %v537
        %v584 = vpop.permute.xlu0 %583
        %587 = vset.pattern.permute.xlu0 0
        %588 = vperm.xlu0 %587, %v538
        %v589 = vpop.permute.xlu0 %588
        %592 = vset.pattern.permute.xlu0 0
        %593 = vperm.xlu0 %592, %v539
        %v594 = vpop.permute.xlu0 %593
        %597 = vset.pattern.permute.xlu0 0
        %598 = vperm.xlu0 %597, %v540
        %v599 = vpop.permute.xlu0 %598
        %602 = vset.pattern.permute.xlu0 0
        %603 = vperm.xlu0 %602, %v541
        %v604 = vpop.permute.xlu0 %603
        %607 = vset.pattern.permute.xlu0 0
        %608 = vperm.xlu0 %607, %v542
        %v609 = vpop.permute.xlu0 %608
        %612 = vset.pattern.permute.xlu0 0
        %613 = vperm.xlu0 %612, %v543
        %v614 = vpop.permute.xlu0 %613
        %617 = vset.pattern.permute.xlu0 0
        %618 = vperm.xlu0 %617, %v544
        %v619 = vpop.permute.xlu0 %618
        %622 = vset.pattern.permute.xlu0 0
        %623 = vperm.xlu0 %622, %v545
        %v624 = vpop.permute.xlu0 %623
        %v642 = vunpack.c.l.b16 %v514
        %v643 = vunpack.c.l.b16 %v515
        %v644 = vunpack.c.l.b16 %v516
        %v645 = vunpack.c.l.b16 %v517
        %v646 = vunpack.c.l.b16 %v518
        %v647 = vunpack.c.l.b16 %v519
        %v648 = vunpack.c.l.b16 %v520
        %v649 = vunpack.c.l.b16 %v521
        %v650 = vunpack.c.l.b16 %v522
        %v651 = vunpack.c.l.b16 %v523
        %v652 = vunpack.c.l.b16 %v524
        %v653 = vunpack.c.l.b16 %v525
        %v654 = vunpack.c.l.b16 %v526
        %v655 = vunpack.c.l.b16 %v527
        %v656 = vunpack.c.l.b16 %v528
        %v657 = vunpack.c.l.b16 %v529
        %v658 = vpack.c.b16 %v643, %v642
        %v659 = vpack.c.b16 %v645, %v644
        %v660 = vpack.c.b16 %v647, %v646
        %v661 = vpack.c.b16 %v649, %v648
        %v662 = vpack.c.b16 %v651, %v650
        %v663 = vpack.c.b16 %v653, %v652
        %v664 = vpack.c.b16 %v655, %v654
        %v665 = vpack.c.b16 %v657, %v656
        %vm666 = vcmask 523264
        %v668 = vsel %vm666, %v658, 0
        %v671 = vsel %vm666, %v659, 0
        %v674 = vsel %vm666, %v660, 0
        %v677 = vsel %vm666, %v661, 0
        %v680 = vsel %vm666, %v662, 0
        %v683 = vsel %vm666, %v663, 0
        %v686 = vsel %vm666, %v664, 0
        %v689 = vsel %vm666, %v665, 0
        %691 = vmatprep.subr.bf16.mxu0 %v499
        %692 = vmatpush1.bf16.msra.mxu0 %v498
        %693 = vmatprep.subr.bf16.mxu0 %v503
        %694 = vmatpush1.bf16.msra.mxu0 %v502
        %695 = vmatprep.subr.bf16.mxu0 %v507
        %696 = vmatpush1.bf16.msra.mxu0 %v506
        %697 = vmatprep.subr.bf16.mxu0 %v511
        %698 = vmatpush1.bf16.msra.mxu0 %v510
        %699 = vmatprep.subr.bf16.mxu0 0
        %700 = vmatpush1.bf16.msra.mxu0 0
        %701 = vmatprep.subr.bf16.mxu0 0
        %702 = vmatpush1.bf16.msra.mxu0 0
        %703 = vmatprep.subr.bf16.mxu0 0
        %704 = vmatpush1.bf16.msra.mxu0 0
        %705 = vmatprep.subr.bf16.mxu0 0
        %706 = vmatpush1.bf16.msra.mxu0 0
        %707 = vmatprep.subr.bf16.mxu0 0
        %708 = vmatpush1.bf16.msra.mxu0 0
        %709 = vmatprep.subr.bf16.mxu0 0
        %710 = vmatpush1.bf16.msra.mxu0 0
        %711 = vmatprep.subr.bf16.mxu0 0
        %712 = vmatpush1.bf16.msra.mxu0 0
        %713 = vmatprep.subr.bf16.mxu0 0
        %714 = vmatpush1.bf16.msra.mxu0 0
        %715 = vmatprep.subr.bf16.mxu0 0
        %716 = vmatpush1.bf16.msra.mxu0 0
        %717 = vmatprep.subr.bf16.mxu0 0
        %718 = vmatpush1.bf16.msra.mxu0 0
        %719 = vmatprep.subr.bf16.mxu0 0
        %720 = vmatpush1.bf16.msra.mxu0 0
        %721 = vmatprep.subr.bf16.mxu0 0
        %722 = vmatpush1.bf16.msra.mxu0 0
        %723 = vmatprep.mubr.bf16.mxu0 0
        %724 = vmatmul.mubr.bf16.gmra.mrb[0].mxu0 %v668
        %v725 = vpop.f32.mrb[0].mxu0
        %v726 = vadd.f32 %v549, %v725
        %v727 = vpop.f32.mrb[0].mxu0
        %v728 = vadd.f32 %v549, %v727
        %v729 = vpop.f32.mrb[0].mxu0
        %v730 = vadd.f32 %v554, %v729
        %v731 = vpop.f32.mrb[0].mxu0
        %v732 = vadd.f32 %v554, %v731
        %733 = vmatprep.mubr.bf16.mxu0 0
        %734 = vmatmul.mubr.bf16.gmra.mrb[0].mxu0 %v671
        %v735 = vpop.f32.mrb[0].mxu0
        %v736 = vadd.f32 %v559, %v735
        %v737 = vpop.f32.mrb[0].mxu0
        %v738 = vadd.f32 %v559, %v737
        %v739 = vpop.f32.mrb[0].mxu0
        %v740 = vadd.f32 %v564, %v739
        %v741 = vpop.f32.mrb[0].mxu0
        %v742 = vadd.f32 %v564, %v741
        %743 = vmatprep.mubr.bf16.mxu0 0
        %744 = vmatmul.mubr.bf16.gmra.mrb[0].mxu0 %v674
        %v745 = vpop.f32.mrb[0].mxu0
        %v746 = vadd.f32 %v569, %v745
        %v747 = vpop.f32.mrb[0].mxu0
        %v748 = vadd.f32 %v569, %v747
        %v749 = vpop.f32.mrb[0].mxu0
        %v750 = vadd.f32 %v574, %v749
        %v751 = vpop.f32.mrb[0].mxu0
        %v752 = vadd.f32 %v574, %v751
        %753 = vmatprep.mubr.bf16.mxu0 0
        %754 = vmatmul.mubr.bf16.gmra.mrb[0].mxu0 %v677
        %v755 = vpop.f32.mrb[0].mxu0
        %v756 = vadd.f32 %v579, %v755
        %v757 = vpop.f32.mrb[0].mxu0
        %v758 = vadd.f32 %v579, %v757
        %v759 = vpop.f32.mrb[0].mxu0
        %v760 = vadd.f32 %v584, %v759
        %v761 = vpop.f32.mrb[0].mxu0
        %v762 = vadd.f32 %v584, %v761
        %763 = vmatprep.mubr.bf16.mxu0 0
        %764 = vmatmul.mubr.bf16.gmra.mrb[0].mxu0 %v680
        %v765 = vpop.f32.mrb[0].mxu0
        %v766 = vadd.f32 %v589, %v765
        %v767 = vpop.f32.mrb[0].mxu0
        %v768 = vadd.f32 %v589, %v767
        %v769 = vpop.f32.mrb[0].mxu0
        %v770 = vadd.f32 %v594, %v769
        %v771 = vpop.f32.mrb[0].mxu0
        %v772 = vadd.f32 %v594, %v771
        %773 = vmatprep.mubr.bf16.mxu0 0
        %774 = vmatmul.mubr.bf16.gmra.mrb[0].mxu0 %v683
        %v775 = vpop.f32.mrb[0].mxu0
        %v776 = vadd.f32 %v599, %v775
        %v777 = vpop.f32.mrb[0].mxu0
        %v778 = vadd.f32 %v599, %v777
        %v779 = vpop.f32.mrb[0].mxu0
        %v780 = vadd.f32 %v604, %v779
        %v781 = vpop.f32.mrb[0].mxu0
        %v782 = vadd.f32 %v604, %v781
        %783 = vmatprep.mubr.bf16.mxu0 0
        %784 = vmatmul.mubr.bf16.gmra.mrb[0].mxu0 %v686
        %v785 = vpop.f32.mrb[0].mxu0
        %v786 = vadd.f32 %v609, %v785
        %v787 = vpop.f32.mrb[0].mxu0
        %v788 = vadd.f32 %v609, %v787
        %v789 = vpop.f32.mrb[0].mxu0
        %v790 = vadd.f32 %v614, %v789
        %v791 = vpop.f32.mrb[0].mxu0
        %v792 = vadd.f32 %v614, %v791
        %793 = vmatprep.mubr.bf16.mxu0 0
        %794 = vmatmul.mubr.bf16.gmra.mrb[0].mxu0 %v689
        %v795 = vpop.f32.mrb[0].mxu0
        %v796 = vadd.f32 %v619, %v795
        %v797 = vpop.f32.mrb[0].mxu0
        %v798 = vadd.f32 %v619, %v797
        %v799 = vpop.f32.mrb[0].mxu0
        %v800 = vadd.f32 %v624, %v799
        %v801 = vpop.f32.mrb[0].mxu0
        %v802 = vadd.f32 %v624, %v801
        %803 = vdwg.mxu0
        %804 = vmatprep.subr.bf16.mxu0 %v501
        %805 = vmatpush1.bf16.msra.mxu0 %v500
        %806 = vmatprep.subr.bf16.mxu0 %v505
        %807 = vmatpush1.bf16.msra.mxu0 %v504
        %808 = vmatprep.subr.bf16.mxu0 %v509
        %809 = vmatpush1.bf16.msra.mxu0 %v508
        %810 = vmatprep.subr.bf16.mxu0 %v513
        %811 = vmatpush1.bf16.msra.mxu0 %v512
        %812 = vmatprep.subr.bf16.mxu0 0
        %813 = vmatpush1.bf16.msra.mxu0 0
        %814 = vmatprep.subr.bf16.mxu0 0
        %815 = vmatpush1.bf16.msra.mxu0 0
        %816 = vmatprep.subr.bf16.mxu0 0
        %817 = vmatpush1.bf16.msra.mxu0 0
        %818 = vmatprep.subr.bf16.mxu0 0
        %819 = vmatpush1.bf16.msra.mxu0 0
        %820 = vmatprep.subr.bf16.mxu0 0
        %821 = vmatpush1.bf16.msra.mxu0 0
        %822 = vmatprep.subr.bf16.mxu0 0
        %823 = vmatpush1.bf16.msra.mxu0 0
        %824 = vmatprep.subr.bf16.mxu0 0
        %825 = vmatpush1.bf16.msra.mxu0 0
        %826 = vmatprep.subr.bf16.mxu0 0
        %827 = vmatpush1.bf16.msra.mxu0 0
        %828 = vmatprep.subr.bf16.mxu0 0
        %829 = vmatpush1.bf16.msra.mxu0 0
        %830 = vmatprep.subr.bf16.mxu0 0
        %831 = vmatpush1.bf16.msra.mxu0 0
        %832 = vmatprep.subr.bf16.mxu0 0
        %833 = vmatpush1.bf16.msra.mxu0 0
        %834 = vmatprep.subr.bf16.mxu0 0
        %835 = vmatpush1.bf16.msra.mxu0 0
        %836 = vmatprep.mubr.bf16.mxu0 0
        %837 = vmatmul.mubr.bf16.gmra.mrb[0].mxu0 %v668
        %v838 = vpop.f32.mrb[0].mxu0
        %v839 = vadd.f32 %v549, %v838
        %v840 = vpop.f32.mrb[0].mxu0
        %v841 = vadd.f32 %v549, %v840
        %v842 = vpop.f32.mrb[0].mxu0
        %v843 = vadd.f32 %v554, %v842
        %v844 = vpop.f32.mrb[0].mxu0
        %v845 = vadd.f32 %v554, %v844
        %846 = vmatprep.mubr.bf16.mxu0 0
        %847 = vmatmul.mubr.bf16.gmra.mrb[0].mxu0 %v671
        %v848 = vpop.f32.mrb[0].mxu0
        %v849 = vadd.f32 %v559, %v848
        %v850 = vpop.f32.mrb[0].mxu0
        %v851 = vadd.f32 %v559, %v850
        %v852 = vpop.f32.mrb[0].mxu0
        %v853 = vadd.f32 %v564, %v852
        %v854 = vpop.f32.mrb[0].mxu0
        %v855 = vadd.f32 %v564, %v854
        %856 = vmatprep.mubr.bf16.mxu0 0
        %857 = vmatmul.mubr.bf16.gmra.mrb[0].mxu0 %v674
        %v858 = vpop.f32.mrb[0].mxu0
        %v859 = vadd.f32 %v569, %v858
        %v860 = vpop.f32.mrb[0].mxu0
        %v861 = vadd.f32 %v569, %v860
        %v862 = vpop.f32.mrb[0].mxu0
        %v863 = vadd.f32 %v574, %v862
        %v864 = vpop.f32.mrb[0].mxu0
        %v865 = vadd.f32 %v574, %v864
        %866 = vmatprep.mubr.bf16.mxu0 0
        %867 = vmatmul.mubr.bf16.gmra.mrb[0].mxu0 %v677
        %v868 = vpop.f32.mrb[0].mxu0
        %v869 = vadd.f32 %v579, %v868
        %v870 = vpop.f32.mrb[0].mxu0
        %v871 = vadd.f32 %v579, %v870
        %v872 = vpop.f32.mrb[0].mxu0
        %v873 = vadd.f32 %v584, %v872
        %v874 = vpop.f32.mrb[0].mxu0
        %v875 = vadd.f32 %v584, %v874
        %876 = vmatprep.mubr.bf16.mxu0 0
        %877 = vmatmul.mubr.bf16.gmra.mrb[0].mxu0 %v680
        %v878 = vpop.f32.mrb[0].mxu0
        %v879 = vadd.f32 %v589, %v878
        %v880 = vpop.f32.mrb[0].mxu0
        %v881 = vadd.f32 %v589, %v880
        %v882 = vpop.f32.mrb[0].mxu0
        %v883 = vadd.f32 %v594, %v882
        %v884 = vpop.f32.mrb[0].mxu0
        %v885 = vadd.f32 %v594, %v884
        %886 = vmatprep.mubr.bf16.mxu0 0
        %887 = vmatmul.mubr.bf16.gmra.mrb[0].mxu0 %v683
        %v888 = vpop.f32.mrb[0].mxu0
        %v889 = vadd.f32 %v599, %v888
        %v890 = vpop.f32.mrb[0].mxu0
        %v891 = vadd.f32 %v599, %v890
        %v892 = vpop.f32.mrb[0].mxu0
        %v893 = vadd.f32 %v604, %v892
        %v894 = vpop.f32.mrb[0].mxu0
        %v895 = vadd.f32 %v604, %v894
        %896 = vmatprep.mubr.bf16.mxu0 0
        %897 = vmatmul.mubr.bf16.gmra.mrb[0].mxu0 %v686
        %v898 = vpop.f32.mrb[0].mxu0
        %v899 = vadd.f32 %v609, %v898
        %v900 = vpop.f32.mrb[0].mxu0
        %v901 = vadd.f32 %v609, %v900
        %v902 = vpop.f32.mrb[0].mxu0
        %v903 = vadd.f32 %v614, %v902
        %v904 = vpop.f32.mrb[0].mxu0
        %v905 = vadd.f32 %v614, %v904
        %906 = vmatprep.mubr.bf16.mxu0 0
        %907 = vmatmul.mubr.bf16.gmra.mrb[0].mxu0 %v689
        %v908 = vpop.f32.mrb[0].mxu0
        %v909 = vadd.f32 %v619, %v908
        %v910 = vpop.f32.mrb[0].mxu0
        %v911 = vadd.f32 %v619, %v910
        %v912 = vpop.f32.mrb[0].mxu0
        %v913 = vadd.f32 %v624, %v912
        %v914 = vpop.f32.mrb[0].mxu0
        %v915 = vadd.f32 %v624, %v914
        %916 = vdwg.mxu0
        %v917 = vld [vmem:[%s436] sm:$0xff]
        %v918 = vld [vmem:[%s436 + $0x8] sm:$0xff]
        %v919 = vld [vmem:[%s436 + $0x10] sm:$0xff]
        %v920 = vld [vmem:[%s436 + $0x18] sm:$0xff]
        %v921 = vld [vmem:[%s436 + $0x20] sm:$0xff]
        %v922 = vld [vmem:[%s436 + $0x28] sm:$0xff]
        %v923 = vld [vmem:[%s436 + $0x30] sm:$0xff]
        %v924 = vld [vmem:[%s436 + $0x38] sm:$0xff]
        %v925 = vld [vmem:[%s436 + $0x40] sm:$0xff]
        %v926 = vld [vmem:[%s436 + $0x48] sm:$0xff]
        %v927 = vld [vmem:[%s436 + $0x50] sm:$0xff]
        %v928 = vld [vmem:[%s436 + $0x58] sm:$0xff]
        %v929 = vld [vmem:[%s436 + $0x60] sm:$0xff]
        %v930 = vld [vmem:[%s436 + $0x68] sm:$0xff]
        %v931 = vld [vmem:[%s436 + $0x70] sm:$0xff]
        %v932 = vld [vmem:[%s436 + $0x78] sm:$0xff]
        %v933 = vld [vmem:[%s436 + $0x80] sm:$0xff]
        %v934 = vld [vmem:[%s436 + $0x88] sm:$0xff]
        %v935 = vld [vmem:[%s436 + $0x90] sm:$0xff]
        %v936 = vld [vmem:[%s436 + $0x98] sm:$0xff]
        %v937 = vld [vmem:[%s436 + $0xa0] sm:$0xff]
        %v938 = vld [vmem:[%s436 + $0xa8] sm:$0xff]
        %v939 = vld [vmem:[%s436 + $0xb0] sm:$0xff]
        %v940 = vld [vmem:[%s436 + $0xb8] sm:$0xff]
        %v941 = vld [vmem:[%s436 + $0xc0] sm:$0xff]
        %v942 = vld [vmem:[%s436 + $0xc8] sm:$0xff]
        %v943 = vld [vmem:[%s436 + $0xd0] sm:$0xff]
        %v944 = vld [vmem:[%s436 + $0xd8] sm:$0xff]
        %v945 = vld [vmem:[%s436 + $0xe0] sm:$0xff]
        %v946 = vld [vmem:[%s436 + $0xe8] sm:$0xff]
        %v947 = vld [vmem:[%s436 + $0xf0] sm:$0xff]
        %v948 = vld [vmem:[%s436 + $0xf8] sm:$0xff]
        %v949 = vld [vmem:[%s436 + $0x100] sm:$0xff]
        %v950 = vld [vmem:[%s436 + $0x108] sm:$0xff]
        %v951 = vld [vmem:[%s436 + $0x110] sm:$0xff]
        %v952 = vld [vmem:[%s436 + $0x118] sm:$0xff]
        %v953 = vld [vmem:[%s436 + $0x120] sm:$0xff]
        %v954 = vld [vmem:[%s436 + $0x128] sm:$0xff]
        %v955 = vld [vmem:[%s436 + $0x130] sm:$0xff]
        %v956 = vld [vmem:[%s436 + $0x138] sm:$0xff]
        %v957 = vld [vmem:[%s436 + $0x140] sm:$0xff]
        %v958 = vld [vmem:[%s436 + $0x148] sm:$0xff]
        %v959 = vld [vmem:[%s436 + $0x150] sm:$0xff]
        %v960 = vld [vmem:[%s436 + $0x158] sm:$0xff]
        %v961 = vld [vmem:[%s436 + $0x160] sm:$0xff]
        %v962 = vld [vmem:[%s436 + $0x168] sm:$0xff]
        %v963 = vld [vmem:[%s436 + $0x170] sm:$0xff]
        %v964 = vld [vmem:[%s436 + $0x178] sm:$0xff]
        %v965 = vld [vmem:[%s436 + $0x180] sm:$0xff]
        %v966 = vld [vmem:[%s436 + $0x188] sm:$0xff]
        %v967 = vld [vmem:[%s436 + $0x190] sm:$0xff]
        %v968 = vld [vmem:[%s436 + $0x198] sm:$0xff]
        %v969 = vld [vmem:[%s436 + $0x1a0] sm:$0xff]
        %v970 = vld [vmem:[%s436 + $0x1a8] sm:$0xff]
        %v971 = vld [vmem:[%s436 + $0x1b0] sm:$0xff]
        %v972 = vld [vmem:[%s436 + $0x1b8] sm:$0xff]
        %v973 = vld [vmem:[%s436 + $0x1c0] sm:$0xff]
        %v974 = vld [vmem:[%s436 + $0x1c8] sm:$0xff]
        %v975 = vld [vmem:[%s436 + $0x1d0] sm:$0xff]
        %v976 = vld [vmem:[%s436 + $0x1d8] sm:$0xff]
        %v977 = vld [vmem:[%s436 + $0x1e0] sm:$0xff]
        %v978 = vld [vmem:[%s436 + $0x1e8] sm:$0xff]
        %v979 = vld [vmem:[%s436 + $0x1f0] sm:$0xff]
        %v980 = vld [vmem:[%s436 + $0x1f8] sm:$0xff]
        %v981 = vadd.f32 %v726, %v917
        %v982 = vadd.f32 %v728, %v918
        %v983 = vadd.f32 %v839, %v919
        %v984 = vadd.f32 %v841, %v920
        %v985 = vadd.f32 %v730, %v921
        %v986 = vadd.f32 %v732, %v922
        %v987 = vadd.f32 %v843, %v923
        %v988 = vadd.f32 %v845, %v924
        %v989 = vadd.f32 %v736, %v925
        %v990 = vadd.f32 %v738, %v926
        %v991 = vadd.f32 %v849, %v927
        %v992 = vadd.f32 %v851, %v928
        %v993 = vadd.f32 %v740, %v929
        %v994 = vadd.f32 %v742, %v930
        %v995 = vadd.f32 %v853, %v931
        %v996 = vadd.f32 %v855, %v932
        %v997 = vadd.f32 %v746, %v933
        %v998 = vadd.f32 %v748, %v934
        %v999 = vadd.f32 %v859, %v935
        %v1000 = vadd.f32 %v861, %v936
        %v1001 = vadd.f32 %v750, %v937
        %v1002 = vadd.f32 %v752, %v938
        %v1003 = vadd.f32 %v863, %v939
        %v1004 = vadd.f32 %v865, %v940
        %v1005 = vadd.f32 %v756, %v941
        %v1006 = vadd.f32 %v758, %v942
        %v1007 = vadd.f32 %v869, %v943
        %v1008 = vadd.f32 %v871, %v944
        %v1009 = vadd.f32 %v760, %v945
        %v1010 = vadd.f32 %v762, %v946
        %v1011 = vadd.f32 %v873, %v947
        %v1012 = vadd.f32 %v875, %v948
        %v1013 = vadd.f32 %v766, %v949
        %v1014 = vadd.f32 %v768, %v950
        %v1015 = vadd.f32 %v879, %v951
        %v1016 = vadd.f32 %v881, %v952
        %v1017 = vadd.f32 %v770, %v953
        %v1018 = vadd.f32 %v772, %v954
        %v1019 = vadd.f32 %v883, %v955
        %v1020 = vadd.f32 %v885, %v956
        %v1021 = vadd.f32 %v776, %v957
        %v1022 = vadd.f32 %v778, %v958
        %v1023 = vadd.f32 %v889, %v959
        %v1024 = vadd.f32 %v891, %v960
        %v1025 = vadd.f32 %v780, %v961
        %v1026 = vadd.f32 %v782, %v962
        %v1027 = vadd.f32 %v893, %v963
        %v1028 = vadd.f32 %v895, %v964
        %v1029 = vadd.f32 %v786, %v965
        %v1030 = vadd.f32 %v788, %v966
        %v1031 = vadd.f32 %v899, %v967
        %v1032 = vadd.f32 %v901, %v968
        %v1033 = vadd.f32 %v790, %v969
        %v1034 = vadd.f32 %v792, %v970
        %v1035 = vadd.f32 %v903, %v971
        %v1036 = vadd.f32 %v905, %v972
        %v1037 = vadd.f32 %v796, %v973
        %v1038 = vadd.f32 %v798, %v974
        %v1039 = vadd.f32 %v909, %v975
        %v1040 = vadd.f32 %v911, %v976
        %v1041 = vadd.f32 %v800, %v977
        %v1042 = vadd.f32 %v802, %v978
        %v1043 = vadd.f32 %v913, %v979
        %v1044 = vadd.f32 %v915, %v980
        %1045 = vst [vmem:[%s461] sm:$0xff] %v981
        %1046 = vst [vmem:[%s461 + $0x8] sm:$0xff] %v982
        %1047 = vst [vmem:[%s461 + $0x10] sm:$0xff] %v983
        %1048 = vst [vmem:[%s461 + $0x18] sm:$0xff] %v984
        %1049 = vst [vmem:[%s461 + $0x20] sm:$0xff] %v985
        %1050 = vst [vmem:[%s461 + $0x28] sm:$0xff] %v986
        %1051 = vst [vmem:[%s461 + $0x30] sm:$0xff] %v987
        %1052 = vst [vmem:[%s461 + $0x38] sm:$0xff] %v988
        %1053 = vst [vmem:[%s461 + $0x40] sm:$0xff] %v989
        %1054 = vst [vmem:[%s461 + $0x48] sm:$0xff] %v990
        %1055 = vst [vmem:[%s461 + $0x50] sm:$0xff] %v991
        %1056 = vst [vmem:[%s461 + $0x58] sm:$0xff] %v992
        %1057 = vst [vmem:[%s461 + $0x60] sm:$0xff] %v993
        %1058 = vst [vmem:[%s461 + $0x68] sm:$0xff] %v994
        %1059 = vst [vmem:[%s461 + $0x70] sm:$0xff] %v995
        %1060 = vst [vmem:[%s461 + $0x78] sm:$0xff] %v996
        %1061 = vst [vmem:[%s461 + $0x80] sm:$0xff] %v997
        %1062 = vst [vmem:[%s461 + $0x88] sm:$0xff] %v998
        %1063 = vst [vmem:[%s461 + $0x90] sm:$0xff] %v999
        %1064 = vst [vmem:[%s461 + $0x98] sm:$0xff] %v1000
        %1065 = vst [vmem:[%s461 + $0xa0] sm:$0xff] %v1001
        %1066 = vst [vmem:[%s461 + $0xa8] sm:$0xff] %v1002
        %1067 = vst [vmem:[%s461 + $0xb0] sm:$0xff] %v1003
        %1068 = vst [vmem:[%s461 + $0xb8] sm:$0xff] %v1004
        %1069 = vst [vmem:[%s461 + $0xc0] sm:$0xff] %v1005
        %1070 = vst [vmem:[%s461 + $0xc8] sm:$0xff] %v1006
        %1071 = vst [vmem:[%s461 + $0xd0] sm:$0xff] %v1007
        %1072 = vst [vmem:[%s461 + $0xd8] sm:$0xff] %v1008
        %1073 = vst [vmem:[%s461 + $0xe0] sm:$0xff] %v1009
        %1074 = vst [vmem:[%s461 + $0xe8] sm:$0xff] %v1010
        %1075 = vst [vmem:[%s461 + $0xf0] sm:$0xff] %v1011
        %1076 = vst [vmem:[%s461 + $0xf8] sm:$0xff] %v1012
        %1077 = vst [vmem:[%s461 + $0x100] sm:$0xff] %v1013
        %1078 = vst [vmem:[%s461 + $0x108] sm:$0xff] %v1014
        %1079 = vst [vmem:[%s461 + $0x110] sm:$0xff] %v1015
        %1080 = vst [vmem:[%s461 + $0x118] sm:$0xff] %v1016
        %1081 = vst [vmem:[%s461 + $0x120] sm:$0xff] %v1017
        %1082 = vst [vmem:[%s461 + $0x128] sm:$0xff] %v1018
        %1083 = vst [vmem:[%s461 + $0x130] sm:$0xff] %v1019
        %1084 = vst [vmem:[%s461 + $0x138] sm:$0xff] %v1020
        %1085 = vst [vmem:[%s461 + $0x140] sm:$0xff] %v1021
        %1086 = vst [vmem:[%s461 + $0x148] sm:$0xff] %v1022
        %1087 = vst [vmem:[%s461 + $0x150] sm:$0xff] %v1023
        %1088 = vst [vmem:[%s461 + $0x158] sm:$0xff] %v1024
        %1089 = vst [vmem:[%s461 + $0x160] sm:$0xff] %v1025
        %1090 = vst [vmem:[%s461 + $0x168] sm:$0xff] %v1026
        %1091 = vst [vmem:[%s461 + $0x170] sm:$0xff] %v1027
        %1092 = vst [vmem:[%s461 + $0x178] sm:$0xff] %v1028
        %1093 = vst [vmem:[%s461 + $0x180] sm:$0xff] %v1029
        %1094 = vst [vmem:[%s461 + $0x188] sm:$0xff] %v1030
        %1095 = vst [vmem:[%s461 + $0x190] sm:$0xff] %v1031
        %1096 = vst [vmem:[%s461 + $0x198] sm:$0xff] %v1032
        %1097 = vst [vmem:[%s461 + $0x1a0] sm:$0xff] %v1033
        %1098 = vst [vmem:[%s461 + $0x1a8] sm:$0xff] %v1034
        %1099 = vst [vmem:[%s461 + $0x1b0] sm:$0xff] %v1035
        %1100 = vst [vmem:[%s461 + $0x1b8] sm:$0xff] %v1036
        %1101 = vst [vmem:[%s461 + $0x1c0] sm:$0xff] %v1037
        %1102 = vst [vmem:[%s461 + $0x1c8] sm:$0xff] %v1038
        %1103 = vst [vmem:[%s461 + $0x1d0] sm:$0xff] %v1039
        %1104 = vst [vmem:[%s461 + $0x1d8] sm:$0xff] %v1040
        %1105 = vst [vmem:[%s461 + $0x1e0] sm:$0xff] %v1041
        %1106 = vst [vmem:[%s461 + $0x1e8] sm:$0xff] %v1042
        %1107 = vst [vmem:[%s461 + $0x1f0] sm:$0xff] %v1043
        %1108 = vst [vmem:[%s461 + $0x1f8] sm:$0xff] %v1044
        %s1109 = sand.u32 %s135, 1
        %s1110 = sand.u32 %s135, 1
        %s1111 = smul.addr %s1110, 512
        %s1112 = scalar_lea.vmem [#allocation4], %s1111
        // Predicated region
        $region83: #{_up_forward.1} parent=73 // pred_check
          %p1113 = pneg %p145
        $region84: #{_up_forward.1} parent=73 // pred_check_branch
          %1115 = sbr.rel (%p1113) target = $region86
        $region85: #{_up_forward.1} parent=73 // pred_region
          %s1116 = smul.u32 4, %s20
          %s1117 = smul.addr %s19, 128
          %s1118 = sadd.s32 %s1116, %s1117
          %s1119 = smul.addr %s1118, 8
          %s1120 = scalar_lea.vmem %s4, %s1119
          // Predicated region
          $region87: #{_up_forward.1} parent=85 // pred_check
            _
          $region88: #{_up_forward.1} parent=85 // pred_check_branch
            %1122 = sbr.rel (0) target = $region90
          $region89: #{_up_forward.1} parent=85 // pred_region
            // Predicated region
            $region91: #{_up_forward.1} parent=89 // pred_check
              _
            $region92: #{_up_forward.1} parent=89 // pred_check_branch
              %1124 = sbr.rel (0) target = $region94
            $region93: #{_up_forward.1} parent=89 // pred_region
              loop: start=0, step=1, limit=1
              $region95: #{_up_forward.1} parent=93 // loop_pre_header
                _
              $region96: #{_up_forward.1} parent=93 // loop_header
                %s1126 = sphi 0, %s1130
                %p1127 = scmp.ge.s32.totalorder %s1126, 1
                %s1131 = sphi %s1112, %s1112
                %s1132 = sphi %s1120, %s1120
              $region97: #{_up_forward.1} parent=93 // loop_header_branch
                %1129 = sbr.rel (%p1127) target = $region101
              $region98: #{_up_forward.1} parent=93 // loop_body
                %v1133 = vld [vmem:[%s1131] sm:$0xff]
                %1134 = vst [vmem:[%s1132] sm:$0xff] %v1133
                %v1135 = vld [vmem:[%s1131 + $0x8] sm:$0xff]
                %1136 = vst [vmem:[%s1132 + $0x8] sm:$0xff] %v1135
                %v1137 = vld [vmem:[%s1131 + $0x10] sm:$0xff]
                %1138 = vst [vmem:[%s1132 + $0x10] sm:$0xff] %v1137
                %v1139 = vld [vmem:[%s1131 + $0x18] sm:$0xff]
                %1140 = vst [vmem:[%s1132 + $0x18] sm:$0xff] %v1139
                %v1141 = vld [vmem:[%s1131 + $0x20] sm:$0xff]
                %1142 = vst [vmem:[%s1132 + $0x40] sm:$0xff] %v1141
                %v1143 = vld [vmem:[%s1131 + $0x28] sm:$0xff]
                %1144 = vst [vmem:[%s1132 + $0x48] sm:$0xff] %v1143
                %v1145 = vld [vmem:[%s1131 + $0x30] sm:$0xff]
                %1146 = vst [vmem:[%s1132 + $0x50] sm:$0xff] %v1145
                %v1147 = vld [vmem:[%s1131 + $0x38] sm:$0xff]
                %1148 = vst [vmem:[%s1132 + $0x58] sm:$0xff] %v1147
                %v1149 = vld [vmem:[%s1131 + $0x40] sm:$0xff]
                %1150 = vst [vmem:[%s1132 + $0x80] sm:$0xff] %v1149
                %v1151 = vld [vmem:[%s1131 + $0x48] sm:$0xff]
                %1152 = vst [vmem:[%s1132 + $0x88] sm:$0xff] %v1151
                %v1153 = vld [vmem:[%s1131 + $0x50] sm:$0xff]
                %1154 = vst [vmem:[%s1132 + $0x90] sm:$0xff] %v1153
                %v1155 = vld [vmem:[%s1131 + $0x58] sm:$0xff]
                %1156 = vst [vmem:[%s1132 + $0x98] sm:$0xff] %v1155
                %v1157 = vld [vmem:[%s1131 + $0x60] sm:$0xff]
                %1158 = vst [vmem:[%s1132 + $0xc0] sm:$0xff] %v1157
                %v1159 = vld [vmem:[%s1131 + $0x68] sm:$0xff]
                %1160 = vst [vmem:[%s1132 + $0xc8] sm:$0xff] %v1159
                %v1161 = vld [vmem:[%s1131 + $0x70] sm:$0xff]
                %1162 = vst [vmem:[%s1132 + $0xd0] sm:$0xff] %v1161
                %v1163 = vld [vmem:[%s1131 + $0x78] sm:$0xff]
                %1164 = vst [vmem:[%s1132 + $0xd8] sm:$0xff] %v1163
                %v1165 = vld [vmem:[%s1131 + $0x80] sm:$0xff]
                %1166 = vst [vmem:[%s1132 + $0x100] sm:$0xff] %v1165
                %v1167 = vld [vmem:[%s1131 + $0x88] sm:$0xff]
                %1168 = vst [vmem:[%s1132 + $0x108] sm:$0xff] %v1167
                %v1169 = vld [vmem:[%s1131 + $0x90] sm:$0xff]
                %1170 = vst [vmem:[%s1132 + $0x110] sm:$0xff] %v1169
                %v1171 = vld [vmem:[%s1131 + $0x98] sm:$0xff]
                %1172 = vst [vmem:[%s1132 + $0x118] sm:$0xff] %v1171
                %v1173 = vld [vmem:[%s1131 + $0xa0] sm:$0xff]
                %1174 = vst [vmem:[%s1132 + $0x140] sm:$0xff] %v1173
                %v1175 = vld [vmem:[%s1131 + $0xa8] sm:$0xff]
                %1176 = vst [vmem:[%s1132 + $0x148] sm:$0xff] %v1175
                %v1177 = vld [vmem:[%s1131 + $0xb0] sm:$0xff]
                %1178 = vst [vmem:[%s1132 + $0x150] sm:$0xff] %v1177
                %v1179 = vld [vmem:[%s1131 + $0xb8] sm:$0xff]
                %1180 = vst [vmem:[%s1132 + $0x158] sm:$0xff] %v1179
                %v1181 = vld [vmem:[%s1131 + $0xc0] sm:$0xff]
                %1182 = vst [vmem:[%s1132 + $0x180] sm:$0xff] %v1181
                %v1183 = vld [vmem:[%s1131 + $0xc8] sm:$0xff]
                %1184 = vst [vmem:[%s1132 + $0x188] sm:$0xff] %v1183
                %v1185 = vld [vmem:[%s1131 + $0xd0] sm:$0xff]
                %1186 = vst [vmem:[%s1132 + $0x190] sm:$0xff] %v1185
                %v1187 = vld [vmem:[%s1131 + $0xd8] sm:$0xff]
                %1188 = vst [vmem:[%s1132 + $0x198] sm:$0xff] %v1187
                %v1189 = vld [vmem:[%s1131 + $0xe0] sm:$0xff]
                %1190 = vst [vmem:[%s1132 + $0x1c0] sm:$0xff] %v1189
                %v1191 = vld [vmem:[%s1131 + $0xe8] sm:$0xff]
                %1192 = vst [vmem:[%s1132 + $0x1c8] sm:$0xff] %v1191
                %v1193 = vld [vmem:[%s1131 + $0xf0] sm:$0xff]
                %1194 = vst [vmem:[%s1132 + $0x1d0] sm:$0xff] %v1193
                %v1195 = vld [vmem:[%s1131 + $0xf8] sm:$0xff]
                %1196 = vst [vmem:[%s1132 + $0x1d8] sm:$0xff] %v1195
                %v1197 = vld [vmem:[%s1131 + $0x100] sm:$0xff]
                %1198 = vst [vmem:[%s1132 + $0x200] sm:$0xff] %v1197
                %v1199 = vld [vmem:[%s1131 + $0x108] sm:$0xff]
                %1200 = vst [vmem:[%s1132 + $0x208] sm:$0xff] %v1199
                %v1201 = vld [vmem:[%s1131 + $0x110] sm:$0xff]
                %1202 = vst [vmem:[%s1132 + $0x210] sm:$0xff] %v1201
                %v1203 = vld [vmem:[%s1131 + $0x118] sm:$0xff]
                %1204 = vst [vmem:[%s1132 + $0x218] sm:$0xff] %v1203
                %v1205 = vld [vmem:[%s1131 + $0x120] sm:$0xff]
                %1206 = vst [vmem:[%s1132 + $0x240] sm:$0xff] %v1205
                %v1207 = vld [vmem:[%s1131 + $0x128] sm:$0xff]
                %1208 = vst [vmem:[%s1132 + $0x248] sm:$0xff] %v1207
                %v1209 = vld [vmem:[%s1131 + $0x130] sm:$0xff]
                %1210 = vst [vmem:[%s1132 + $0x250] sm:$0xff] %v1209
                %v1211 = vld [vmem:[%s1131 + $0x138] sm:$0xff]
                %1212 = vst [vmem:[%s1132 + $0x258] sm:$0xff] %v1211
                %v1213 = vld [vmem:[%s1131 + $0x140] sm:$0xff]
                %1214 = vst [vmem:[%s1132 + $0x280] sm:$0xff] %v1213
                %v1215 = vld [vmem:[%s1131 + $0x148] sm:$0xff]
                %1216 = vst [vmem:[%s1132 + $0x288] sm:$0xff] %v1215
                %v1217 = vld [vmem:[%s1131 + $0x150] sm:$0xff]
                %1218 = vst [vmem:[%s1132 + $0x290] sm:$0xff] %v1217
                %v1219 = vld [vmem:[%s1131 + $0x158] sm:$0xff]
                %1220 = vst [vmem:[%s1132 + $0x298] sm:$0xff] %v1219
                %v1221 = vld [vmem:[%s1131 + $0x160] sm:$0xff]
                %1222 = vst [vmem:[%s1132 + $0x2c0] sm:$0xff] %v1221
                %v1223 = vld [vmem:[%s1131 + $0x168] sm:$0xff]
                %1224 = vst [vmem:[%s1132 + $0x2c8] sm:$0xff] %v1223
                %v1225 = vld [vmem:[%s1131 + $0x170] sm:$0xff]
                %1226 = vst [vmem:[%s1132 + $0x2d0] sm:$0xff] %v1225
                %v1227 = vld [vmem:[%s1131 + $0x178] sm:$0xff]
                %1228 = vst [vmem:[%s1132 + $0x2d8] sm:$0xff] %v1227
                %v1229 = vld [vmem:[%s1131 + $0x180] sm:$0xff]
                %1230 = vst [vmem:[%s1132 + $0x300] sm:$0xff] %v1229
                %v1231 = vld [vmem:[%s1131 + $0x188] sm:$0xff]
                %1232 = vst [vmem:[%s1132 + $0x308] sm:$0xff] %v1231
                %v1233 = vld [vmem:[%s1131 + $0x190] sm:$0xff]
                %1234 = vst [vmem:[%s1132 + $0x310] sm:$0xff] %v1233
                %v1235 = vld [vmem:[%s1131 + $0x198] sm:$0xff]
                %1236 = vst [vmem:[%s1132 + $0x318] sm:$0xff] %v1235
                %v1237 = vld [vmem:[%s1131 + $0x1a0] sm:$0xff]
                %1238 = vst [vmem:[%s1132 + $0x340] sm:$0xff] %v1237
                %v1239 = vld [vmem:[%s1131 + $0x1a8] sm:$0xff]
                %1240 = vst [vmem:[%s1132 + $0x348] sm:$0xff] %v1239
                %v1241 = vld [vmem:[%s1131 + $0x1b0] sm:$0xff]
                %1242 = vst [vmem:[%s1132 + $0x350] sm:$0xff] %v1241
                %v1243 = vld [vmem:[%s1131 + $0x1b8] sm:$0xff]
                %1244 = vst [vmem:[%s1132 + $0x358] sm:$0xff] %v1243
                %v1245 = vld [vmem:[%s1131 + $0x1c0] sm:$0xff]
                %1246 = vst [vmem:[%s1132 + $0x380] sm:$0xff] %v1245
                %v1247 = vld [vmem:[%s1131 + $0x1c8] sm:$0xff]
                %1248 = vst [vmem:[%s1132 + $0x388] sm:$0xff] %v1247
                %v1249 = vld [vmem:[%s1131 + $0x1d0] sm:$0xff]
                %1250 = vst [vmem:[%s1132 + $0x390] sm:$0xff] %v1249
                %v1251 = vld [vmem:[%s1131 + $0x1d8] sm:$0xff]
                %1252 = vst [vmem:[%s1132 + $0x398] sm:$0xff] %v1251
                %v1253 = vld [vmem:[%s1131 + $0x1e0] sm:$0xff]
                %1254 = vst [vmem:[%s1132 + $0x3c0] sm:$0xff] %v1253
                %v1255 = vld [vmem:[%s1131 + $0x1e8] sm:$0xff]
                %1256 = vst [vmem:[%s1132 + $0x3c8] sm:$0xff] %v1255
                %v1257 = vld [vmem:[%s1131 + $0x1f0] sm:$0xff]
                %1258 = vst [vmem:[%s1132 + $0x3d0] sm:$0xff] %v1257
                %v1259 = vld [vmem:[%s1131 + $0x1f8] sm:$0xff]
                %1260 = vst [vmem:[%s1132 + $0x3d8] sm:$0xff] %v1259
              $region99: #{_up_forward.1} parent=93 // loop_footer
                %s1130 = sadd.s32 1, %s1126
              $region100: #{_up_forward.1} parent=93 // loop_footer_branch
                %1125 = sbr.rel target = $region96
              $region101: #{_up_forward.1} parent=93 // loop_exit
                _
            $region94: #{_up_forward.1} parent=89 // pred_fallthru
              _
            // Predicated region
            $region102: #{_up_forward.1} parent=89 // pred_check
              _
            $region103: #{_up_forward.1} parent=89 // pred_check_branch
              %1262 = sbr.rel target = $region105
            $region104: #{_up_forward.1} parent=89 // pred_region
              _
            $region105: #{_up_forward.1} parent=89 // pred_fallthru
              _
          $region90: #{_up_forward.1} parent=85 // pred_fallthru
            _
          %1263 = vnop
        $region86: #{_up_forward.1} parent=73 // pred_fallthru
          _
      $region74: #{_up_forward.1} parent=5 // pred_fallthru
        _
      %p1264 = scmp.le.s32.totalorder 2, %s10
      // Predicated region
      $region106: #{_up_forward.1} parent=5 // pred_check
        %p1265 = pneg %p1264
      $region107: #{_up_forward.1} parent=5 // pred_check_branch
        %1267 = sbr.rel (%p1265) target = $region109
      $region108: #{_up_forward.1} parent=5 // pred_region
        %s1268 = ssub.s32 %s10, 2
        // Predicated region
        $region110: #{_up_forward.1} parent=108 // pred_check
          %p1269 = pneg %p151
        $region111: #{_up_forward.1} parent=108 // pred_check_branch
          %1271 = sbr.rel (%p1269) target = $region113
        $region112: #{_up_forward.1} parent=108 // pred_region
          %s1272 = sand.u32 %s136, 1
          %s1273 = sand.u32 %s136, 1
          %s1274 = smul.addr %s1273, 512
          %s1275 = scalar_lea.vmem [#allocation4], %s1274
        $region113: #{_up_forward.1} parent=108 // pred_fallthru
          _
      $region109: #{_up_forward.1} parent=5 // pred_fallthru
        _
    $region6: #{_up_forward.1} parent=1 // loop_footer
      %s14 = sadd.s32 1, %s10
    $region7: #{_up_forward.1} parent=1 // loop_footer_branch
      %9 = sbr.rel target = $region3
    $region8: #{_up_forward.1} parent=1 // loop_exit
      _

</llo_original>
